<compile_context>
chip_gen: v7x
topology: tpu7x:2x2x1
jax: 0.10.0
libtpu: 0.0.40
codegen_flags: <defaults>
</compile_context>

<pallas_src>
import functools

import jax
import jax.numpy as jnp
import numpy as np
from jax.experimental import pallas as pl
from jax.experimental.pallas import tpu as pltpu


def _block_kernel(x_ref, wqkv_ref, bqkv_ref, wo_ref, bo_ref, gamma_ref, beta_ref,
                  o_ref, q_sc, k_sc, v_sc, ctx_sc,
                  *, num_heads, head_dim, block_q, qkv_chunk, eps):
    """Grid = (batch, q_tile). One query tile of one batch element per grid step."""
    qi = pl.program_id(1)
    d_model = num_heads * head_dim
    seq_len = x_ref.shape[1]

    # ---- Fused QKV projection, chunked over S, once per batch element (qi == 0) ----
    @pl.when(qi == 0)
    def _compute_qkv():
        bqkv = bqkv_ref[0]                                               # (3D,) f32
        for c in range(seq_len // qkv_chunk):                            # static unroll
            c0 = c * qkv_chunk
            xc = x_ref[0, pl.ds(c0, qkv_chunk), :].astype(jnp.bfloat16)  # (C, D)
            qkv = jnp.dot(xc, wqkv_ref[...],
                          preferred_element_type=jnp.float32) + bqkv     # (C, 3D) f32
            # Head split into head-major (H, S, Dh) bf16 scratch (once per batch element).
            # TODO(synk): replace with a layout-aware einshape split once verified on all gens.
            for h in range(num_heads):
                lo = h * head_dim
                q_sc[h, pl.ds(c0, qkv_chunk), :] = \
                    qkv[:, lo:lo + head_dim].astype(jnp.bfloat16)        # scale folded into Wq
                k_sc[h, pl.ds(c0, qkv_chunk), :] = \
                    qkv[:, d_model + lo:d_model + lo + head_dim].astype(jnp.bfloat16)
                v_sc[h, pl.ds(c0, qkv_chunk), :] = \
                    qkv[:, 2 * d_model + lo:2 * d_model + lo + head_dim].astype(jnp.bfloat16)

    # ---- Batched-head attention for this query tile ----
    row0 = pl.multiple_of(qi * block_q, block_q)
    q_t = q_sc[:, pl.ds(row0, block_q), :]                               # (H, TQ, Dh) bf16
    k = k_sc[...]                                                        # (H, S, Dh)  bf16
    v = v_sc[...]                                                        # (H, S, Dh)  bf16

    s = jnp.einsum("hqd,hkd->hqk", q_t, k,
                   preferred_element_type=jnp.float32)                   # (H, TQ, S) f32
    s = s - jnp.max(s, axis=-1, keepdims=True)
    p = jnp.exp(s)                                                       # (H, TQ, S) f32
    l = jnp.sum(p, axis=-1, keepdims=True)                               # (H, TQ, 1) f32
    ctx = jnp.einsum("hqk,hkd->hqd", p.astype(jnp.bfloat16), v,
                     preferred_element_type=jnp.float32)                 # (H, TQ, Dh) f32
    # Normalize after the PV matmul: small (H, TQ, Dh) scale instead of (H, TQ, S).
    ctx = ctx * pl.reciprocal(l, approx=True)
    ctx_bf = ctx.astype(jnp.bfloat16)

    # ---- Merge heads into a lane-dense (TQ, D) slab, then ONE full-K=D output matmul ----
    for h in range(num_heads):
        ctx_sc[:, h * head_dim:(h + 1) * head_dim] = ctx_bf[h]
    proj = jnp.dot(ctx_sc[...], wo_ref[...],
                   preferred_element_type=jnp.float32) + bo_ref[0]       # (TQ, D) f32

    # ---- Residual (DropPath == identity at inference) + LayerNorm over D (f32) ----
    y = x_ref[0, pl.ds(row0, block_q), :] + proj
    mean = jnp.mean(y, axis=-1, keepdims=True)
    var = jnp.mean((y - mean) ** 2, axis=-1, keepdims=True)
    y = (y - mean) * jax.lax.rsqrt(var + eps)
    o_ref[0] = (y * gamma_ref[0] + beta_ref[0]).astype(o_ref.dtype)


def _pad(n, m):
    return ((n + m - 1) // m) * m


def _vmem_budget_bytes(S, D, H, Dh, block_q):
    """Padding-aware VMEM estimate (lane pad to 128, bf16 sublane pad to 16)."""
    bf, f32 = 2, 4
    qkv_scratch = 3 * H * _pad(S, 16) * _pad(Dh, 128) * bf          # head-major Q/K/V (lane padded!)
    ctx_scratch = _pad(block_q, 16) * _pad(D, 128) * bf
    weights = 2 * (_pad(D, 16) * _pad(3 * D, 128) + _pad(D, 16) * _pad(D, 128)) * bf  # dbl-buffered
    vecs = 2 * 4 * _pad(D, 128) * f32
    x_block = 2 * _pad(S, 8) * _pad(D, 128) * f32
    out_block = 2 * _pad(block_q, 8) * _pad(D, 128) * f32
    temps = (H * _pad(block_q, 8) * _pad(S, 128) * (2 * f32 + bf)   # logits + exp + bf16 p
             + _pad(block_q, 8) * _pad(3 * D, 128) * f32)           # qkv chunk
    return qkv_scratch + ctx_scratch + weights + vecs + x_block + out_block + temps


def residual_attention_block(x, params, *, num_heads, block_q=None, qkv_chunk=None, eps=1e-5):
    B, S, D = x.shape
    assert D % num_heads == 0
    head_dim = D // num_heads
    assert D % 128 == 0, "d_model must be lane-dense (multiple of 128)"
    if block_q is None:
        block_q = S if S <= 128 else 128
    assert S % block_q == 0 and (block_q == S or block_q % 16 == 0)
    n_q_tiles = S // block_q
    if qkv_chunk is None:
        qkv_chunk = S if S <= 256 else 256
    assert S % qkv_chunk == 0

    scale = 1.0 / (head_dim ** 0.5)
    # Fold the 1/sqrt(head_dim) query scale into Wq / bq (static weight transform, no runtime cost);
    # fuse QKV weights and cast to bf16 (MXU rate, f32 accumulation in-kernel).
    wqkv = jnp.concatenate(
        [params["wq"] * scale, params["wk"], params["wv"]], axis=1).astype(jnp.bfloat16)   # (D, 3D)
    bqkv = jnp.concatenate([params["bq"] * scale, params["bk"], params["bv"]], axis=1)      # (1, 3D)
    wo = params["wo"].astype(jnp.bfloat16)                                                  # (D, D)
    bo, gamma, beta = params["bo"], params["ln_gamma"], params["ln_beta"]

    kernel = functools.partial(_block_kernel, num_heads=num_heads, head_dim=head_dim,
                               block_q=block_q, qkv_chunk=qkv_chunk, eps=eps)

    # Weight index maps are constant -> blocks stay resident across the grid.
    in_specs = [
        pl.BlockSpec((1, S, D), lambda b, q: (b, 0, 0)),       # x: full sequence (residual + QKV src)
        pl.BlockSpec((D, 3 * D), lambda b, q: (0, 0)),         # fused Wqkv (bf16, q-scale folded in)
        pl.BlockSpec((1, 3 * D), lambda b, q: (0, 0)),         # fused bqkv (f32)
        pl.BlockSpec((D, D), lambda b, q: (0, 0)),             # Wo (bf16, lane-dense full-K matmul)
        pl.BlockSpec((1, D), lambda b, q: (0, 0)),             # bo
        pl.BlockSpec((1, D), lambda b, q: (0, 0)),             # LN gamma
        pl.BlockSpec((1, D), lambda b, q: (0, 0)),             # LN beta
    ]
    out_specs = pl.BlockSpec((1, block_q, D), lambda b, q: (b, q, 0))
    scratch_shapes = (
        [pltpu.VMEM((num_heads, S, head_dim), jnp.bfloat16)] * 3   # Q, K, V (head-major)
        + [pltpu.VMEM((block_q, D), jnp.bfloat16)]                 # merged-head context slab
    )

    vmem_limit = min(max(_vmem_budget_bytes(S, D, num_heads, head_dim, block_q) + (8 << 20),
                         32 << 20), 100 << 20)

    # NOTE: with batch as the only "parallel" axis, B=1 strands one v7x TensorCore; restructure
    # (q-tiles across cores with per-core QKV recompute) if tiny-batch v7x inference matters.
    return pl.pallas_call(
        kernel,
        out_shape=jax.ShapeDtypeStruct((B, S, D), jnp.float32),
        grid_spec=pltpu.PrefetchScalarGridSpec(
            num_scalar_prefetch=0,
            grid=(B, n_q_tiles),
            in_specs=in_specs,
            out_specs=out_specs,
            scratch_shapes=scratch_shapes),
        compiler_params=pltpu.CompilerParams(
            dimension_semantics=("parallel", "arbitrary"),
            vmem_limit_bytes=vmem_limit),
    )(x, wqkv, bqkv, wo, bo, gamma, beta)


def _reference(x, params, *, num_heads, eps=1e-5):
    """Pure-JAX reference mirroring the kernel's bf16-matmul / f32-accumulation policy."""
    B, S, D = x.shape
    Dh = D // num_heads
    bf = jnp.bfloat16

    def proj(x_, w, b):
        return jnp.dot(x_.astype(bf), w.astype(bf),
                       preferred_element_type=jnp.float32) + b[0]

    q = proj(x, params["wq"], params["bq"]) * (1.0 / (Dh ** 0.5))
    k = proj(x, params["wk"], params["bk"])
    v = proj(x, params["wv"], params["bv"])

    def heads(t):
        return t.reshape(B, S, num_heads, Dh).transpose(0, 2, 1, 3).astype(bf)

    qh, kh, vh = heads(q), heads(k), heads(v)
    s = jnp.einsum("bhqd,bhkd->bhqk", qh, kh, preferred_element_type=jnp.float32)
    p = jax.nn.softmax(s, axis=-1)
    o = jnp.einsum("bhqk,bhkd->bhqd", p.astype(bf), vh, preferred_element_type=jnp.float32)
    o = o.transpose(0, 2, 1, 3).reshape(B, S, D)
    o = jnp.dot(o.astype(bf), params["wo"].astype(bf),
                preferred_element_type=jnp.float32) + params["bo"][0]

    y = x + o
    mean = jnp.mean(y, axis=-1, keepdims=True)
    var = jnp.mean((y - mean) ** 2, axis=-1, keepdims=True)
    y = (y - mean) * jax.lax.rsqrt(var + eps)
    return y * params["ln_gamma"][0] + params["ln_beta"][0]


def make_params(key, d_model):
    ks = jax.random.split(key, 8)
    scale = 0.05
    return {
        "wq": scale * jax.random.normal(ks[0], (d_model, d_model), jnp.float32),
        "bq": scale * jax.random.normal(ks[1], (1, d_model), jnp.float32),
        "wk": scale * jax.random.normal(ks[2], (d_model, d_model), jnp.float32),
        "bk": scale * jax.random.normal(ks[3], (1, d_model), jnp.float32),
        "wv": scale * jax.random.normal(ks[4], (d_model, d_model), jnp.float32),
        "bv": scale * jax.random.normal(ks[5], (1, d_model), jnp.float32),
        "wo": scale * jax.random.normal(ks[6], (d_model, d_model), jnp.float32),
        "bo": scale * jax.random.normal(ks[7], (1, d_model), jnp.float32),
        "ln_gamma": jnp.ones((1, d_model), jnp.float32),
        "ln_beta": jnp.zeros((1, d_model), jnp.float32),
    }


if __name__ == "__main__":
    # Small, lane-aligned demo shapes (D multiple of 128; two query tiles per batch element).
    B, S, D, H = 2, 32, 128, 4

    key = jax.random.PRNGKey(0)
    k_x, k_p = jax.random.split(key)
    x = jax.random.normal(k_x, (B, S, D), jnp.float32)
    params = make_params(k_p, D)

    out = residual_attention_block(x, params, num_heads=H, block_q=16)
    out = jax.block_until_ready(out)

    ref = jax.block_until_ready(_reference(x, params, num_heads=H))
    # Both kernel and reference use bf16 matmul operands with f32 accumulation; remaining deltas
    # (approx reciprocal, normalize-after-PV ordering, scale folded into bf16 Wq) are << 2e-2.
    np.testing.assert_allclose(np.asarray(out), np.asarray(ref), atol=2e-2, rtol=2e-2)

    print("KERNEL_OK")
</pallas_src>

<mosaic_0001>
module attributes {stable_mosaic.version = 11 : i64} {
  func.func @_block_kernel(%arg0: i32, %arg1: i32, %arg2: memref<1x32x128xf32, #tpu.memory_space<vmem>>, %arg3: memref<128x384xbf16, #tpu.memory_space<vmem>>, %arg4: memref<1x384xf32, #tpu.memory_space<vmem>>, %arg5: memref<128x128xbf16, #tpu.memory_space<vmem>>, %arg6: memref<1x128xf32, #tpu.memory_space<vmem>>, %arg7: memref<1x128xf32, #tpu.memory_space<vmem>>, %arg8: memref<1x128xf32, #tpu.memory_space<vmem>>, %arg9: memref<1x16x128xf32, #tpu.memory_space<vmem>>, %arg10: memref<4x32x32xbf16, #tpu.memory_space<vmem>>, %arg11: memref<4x32x32xbf16, #tpu.memory_space<vmem>>, %arg12: memref<4x32x32xbf16, #tpu.memory_space<vmem>>, %arg13: memref<16x128xbf16, #tpu.memory_space<vmem>>) attributes {dimension_semantics = [#tpu.dimension_semantics<parallel>, #tpu.dimension_semantics<arbitrary>], iteration_bounds = array<i64: 2, 2>, scalar_prefetch = 0 : i64, scratch_operands = 4 : i64, tpu.core_type = #tpu.core_type<tc>, window_params = [{transform_indices = @transform_0, window_bounds = array<i64: 1, 32, 128>}, {pipeline_mode = #tpu.pipeline_mode<synchronous>, transform_indices = @transform_1, window_bounds = array<i64: 128, 384>}, {pipeline_mode = #tpu.pipeline_mode<synchronous>, transform_indices = @transform_2, window_bounds = array<i64: 1, 384>}, {pipeline_mode = #tpu.pipeline_mode<synchronous>, transform_indices = @transform_3, window_bounds = array<i64: 128, 128>}, {pipeline_mode = #tpu.pipeline_mode<synchronous>, transform_indices = @transform_4, window_bounds = array<i64: 1, 128>}, {pipeline_mode = #tpu.pipeline_mode<synchronous>, transform_indices = @transform_5, window_bounds = array<i64: 1, 128>}, {pipeline_mode = #tpu.pipeline_mode<synchronous>, transform_indices = @transform_6, window_bounds = array<i64: 1, 128>}, {transform_indices = @transform_7, window_bounds = array<i64: 1, 16, 128>}]} {
    %c0_i32 = arith.constant 0 : i32
    %0 = arith.cmpi eq, %arg1, %c0_i32 : i32
    %1 = arith.extui %0 : i1 to i32
    %c0_i32_0 = arith.constant 0 : i32
    %2 = arith.cmpi ne, %1, %c0_i32_0 : i32
    scf.if %2 {
      %c0_37 = arith.constant 0 : index
      %c0_38 = arith.constant 0 : index
      %78 = vector.load %arg4[%c0_37, %c0_38] : memref<1x384xf32, #tpu.memory_space<vmem>>, vector<1x384xf32>
      %79 = vector.shape_cast %78 : vector<1x384xf32> to vector<384xf32>
      %c0_39 = arith.constant 0 : index
      %c0_40 = arith.constant 0 : index
      %c0_41 = arith.constant 0 : index
      %80 = vector.load %arg2[%c0_39, %c0_40, %c0_41] : memref<1x32x128xf32, #tpu.memory_space<vmem>>, vector<1x32x128xf32>
      %81 = vector.shape_cast %80 : vector<1x32x128xf32> to vector<32x128xf32>
      %82 = arith.truncf %81 : vector<32x128xf32> to vector<32x128xbf16>
      %c0_42 = arith.constant 0 : index
      %c0_43 = arith.constant 0 : index
      %83 = vector.load %arg3[%c0_42, %c0_43] : memref<128x384xbf16, #tpu.memory_space<vmem>>, vector<128x384xbf16>
      %cst_44 = arith.constant dense<0.000000e+00> : vector<32x384xf32>
      %84 = tpu.matmul %82, %83, %cst_44 {dimension_numbers = #tpu.dot_dimension_numbers<[1], [0], [0], [1], [0, 0, 1, 1], [], []>} : vector<32x128xbf16>, vector<128x384xbf16>, vector<32x384xf32> -> vector<32x384xf32>
      %85 = vector.shape_cast %79 : vector<384xf32> to vector<1x384xf32>
      %86 = vector.broadcast %85 : vector<1x384xf32> to vector<32x384xf32>
      %87 = arith.addf %84, %86 : vector<32x384xf32>
      %88 = vector.extract_strided_slice %87 {offsets = [0, 0], sizes = [32, 32], strides = [1, 1]} : vector<32x384xf32> to vector<32x32xf32>
      %89 = arith.truncf %88 : vector<32x32xf32> to vector<32x32xbf16>
      %c0_45 = arith.constant 0 : index
      %c0_46 = arith.constant 0 : index
      %c0_47 = arith.constant 0 : index
      %90 = vector.load %arg10[%c0_45, %c0_46, %c0_47] : memref<4x32x32xbf16, #tpu.memory_space<vmem>>, vector<1x32x32xbf16>
      %91 = vector.shape_cast %90 : vector<1x32x32xbf16> to vector<32x32xbf16>
      %92 = vector.shape_cast %89 : vector<32x32xbf16> to vector<1x32x32xbf16>
      tpu.vector_store %arg10[%c0_45, %c0_46, %c0_47], %92 {strides = array<i32>} : memref<4x32x32xbf16, #tpu.memory_space<vmem>>, vector<1x32x32xbf16>,
      %93 = vector.extract_strided_slice %87 {offsets = [0, 128], sizes = [32, 32], strides = [1, 1]} : vector<32x384xf32> to vector<32x32xf32>
      %94 = arith.truncf %93 : vector<32x32xf32> to vector<32x32xbf16>
      %c0_48 = arith.constant 0 : index
      %c0_49 = arith.constant 0 : index
      %c0_50 = arith.constant 0 : index
      %95 = vector.load %arg11[%c0_48, %c0_49, %c0_50] : memref<4x32x32xbf16, #tpu.memory_space<vmem>>, vector<1x32x32xbf16>
      %96 = vector.shape_cast %95 : vector<1x32x32xbf16> to vector<32x32xbf16>
      %97 = vector.shape_cast %94 : vector<32x32xbf16> to vector<1x32x32xbf16>
      tpu.vector_store %arg11[%c0_48, %c0_49, %c0_50], %97 {strides = array<i32>} : memref<4x32x32xbf16, #tpu.memory_space<vmem>>, vector<1x32x32xbf16>,
      %98 = vector.extract_strided_slice %87 {offsets = [0, 256], sizes = [32, 32], strides = [1, 1]} : vector<32x384xf32> to vector<32x32xf32>
      %99 = arith.truncf %98 : vector<32x32xf32> to vector<32x32xbf16>
      %c0_51 = arith.constant 0 : index
      %c0_52 = arith.constant 0 : index
      %c0_53 = arith.constant 0 : index
      %100 = vector.load %arg12[%c0_51, %c0_52, %c0_53] : memref<4x32x32xbf16, #tpu.memory_space<vmem>>, vector<1x32x32xbf16>
      %101 = vector.shape_cast %100 : vector<1x32x32xbf16> to vector<32x32xbf16>
      %102 = vector.shape_cast %99 : vector<32x32xbf16> to vector<1x32x32xbf16>
      tpu.vector_store %arg12[%c0_51, %c0_52, %c0_53], %102 {strides = array<i32>} : memref<4x32x32xbf16, #tpu.memory_space<vmem>>, vector<1x32x32xbf16>,
      %103 = vector.extract_strided_slice %87 {offsets = [0, 32], sizes = [32, 32], strides = [1, 1]} : vector<32x384xf32> to vector<32x32xf32>
      %104 = arith.truncf %103 : vector<32x32xf32> to vector<32x32xbf16>
      %c1 = arith.constant 1 : index
      %c0_54 = arith.constant 0 : index
      %c0_55 = arith.constant 0 : index
      %105 = vector.load %arg10[%c1, %c0_54, %c0_55] : memref<4x32x32xbf16, #tpu.memory_space<vmem>>, vector<1x32x32xbf16>
      %106 = vector.shape_cast %105 : vector<1x32x32xbf16> to vector<32x32xbf16>
      %107 = vector.shape_cast %104 : vector<32x32xbf16> to vector<1x32x32xbf16>
      tpu.vector_store %arg10[%c1, %c0_54, %c0_55], %107 {strides = array<i32>} : memref<4x32x32xbf16, #tpu.memory_space<vmem>>, vector<1x32x32xbf16>,
      %108 = vector.extract_strided_slice %87 {offsets = [0, 160], sizes = [32, 32], strides = [1, 1]} : vector<32x384xf32> to vector<32x32xf32>
      %109 = arith.truncf %108 : vector<32x32xf32> to vector<32x32xbf16>
      %c1_56 = arith.constant 1 : index
      %c0_57 = arith.constant 0 : index
      %c0_58 = arith.constant 0 : index
      %110 = vector.load %arg11[%c1_56, %c0_57, %c0_58] : memref<4x32x32xbf16, #tpu.memory_space<vmem>>, vector<1x32x32xbf16>
      %111 = vector.shape_cast %110 : vector<1x32x32xbf16> to vector<32x32xbf16>
      %112 = vector.shape_cast %109 : vector<32x32xbf16> to vector<1x32x32xbf16>
      tpu.vector_store %arg11[%c1_56, %c0_57, %c0_58], %112 {strides = array<i32>} : memref<4x32x32xbf16, #tpu.memory_space<vmem>>, vector<1x32x32xbf16>,
      %113 = vector.extract_strided_slice %87 {offsets = [0, 288], sizes = [32, 32], strides = [1, 1]} : vector<32x384xf32> to vector<32x32xf32>
      %114 = arith.truncf %113 : vector<32x32xf32> to vector<32x32xbf16>
      %c1_59 = arith.constant 1 : index
      %c0_60 = arith.constant 0 : index
      %c0_61 = arith.constant 0 : index
      %115 = vector.load %arg12[%c1_59, %c0_60, %c0_61] : memref<4x32x32xbf16, #tpu.memory_space<vmem>>, vector<1x32x32xbf16>
      %116 = vector.shape_cast %115 : vector<1x32x32xbf16> to vector<32x32xbf16>
      %117 = vector.shape_cast %114 : vector<32x32xbf16> to vector<1x32x32xbf16>
      tpu.vector_store %arg12[%c1_59, %c0_60, %c0_61], %117 {strides = array<i32>} : memref<4x32x32xbf16, #tpu.memory_space<vmem>>, vector<1x32x32xbf16>,
      %118 = vector.extract_strided_slice %87 {offsets = [0, 64], sizes = [32, 32], strides = [1, 1]} : vector<32x384xf32> to vector<32x32xf32>
      %119 = arith.truncf %118 : vector<32x32xf32> to vector<32x32xbf16>
      %c2 = arith.constant 2 : index
      %c0_62 = arith.constant 0 : index
      %c0_63 = arith.constant 0 : index
      %120 = vector.load %arg10[%c2, %c0_62, %c0_63] : memref<4x32x32xbf16, #tpu.memory_space<vmem>>, vector<1x32x32xbf16>
      %121 = vector.shape_cast %120 : vector<1x32x32xbf16> to vector<32x32xbf16>
      %122 = vector.shape_cast %119 : vector<32x32xbf16> to vector<1x32x32xbf16>
      tpu.vector_store %arg10[%c2, %c0_62, %c0_63], %122 {strides = array<i32>} : memref<4x32x32xbf16, #tpu.memory_space<vmem>>, vector<1x32x32xbf16>,
      %123 = vector.extract_strided_slice %87 {offsets = [0, 192], sizes = [32, 32], strides = [1, 1]} : vector<32x384xf32> to vector<32x32xf32>
      %124 = arith.truncf %123 : vector<32x32xf32> to vector<32x32xbf16>
      %c2_64 = arith.constant 2 : index
      %c0_65 = arith.constant 0 : index
      %c0_66 = arith.constant 0 : index
      %125 = vector.load %arg11[%c2_64, %c0_65, %c0_66] : memref<4x32x32xbf16, #tpu.memory_space<vmem>>, vector<1x32x32xbf16>
      %126 = vector.shape_cast %125 : vector<1x32x32xbf16> to vector<32x32xbf16>
      %127 = vector.shape_cast %124 : vector<32x32xbf16> to vector<1x32x32xbf16>
      tpu.vector_store %arg11[%c2_64, %c0_65, %c0_66], %127 {strides = array<i32>} : memref<4x32x32xbf16, #tpu.memory_space<vmem>>, vector<1x32x32xbf16>,
      %128 = vector.extract_strided_slice %87 {offsets = [0, 320], sizes = [32, 32], strides = [1, 1]} : vector<32x384xf32> to vector<32x32xf32>
      %129 = arith.truncf %128 : vector<32x32xf32> to vector<32x32xbf16>
      %c2_67 = arith.constant 2 : index
      %c0_68 = arith.constant 0 : index
      %c0_69 = arith.constant 0 : index
      %130 = vector.load %arg12[%c2_67, %c0_68, %c0_69] : memref<4x32x32xbf16, #tpu.memory_space<vmem>>, vector<1x32x32xbf16>
      %131 = vector.shape_cast %130 : vector<1x32x32xbf16> to vector<32x32xbf16>
      %132 = vector.shape_cast %129 : vector<32x32xbf16> to vector<1x32x32xbf16>
      tpu.vector_store %arg12[%c2_67, %c0_68, %c0_69], %132 {strides = array<i32>} : memref<4x32x32xbf16, #tpu.memory_space<vmem>>, vector<1x32x32xbf16>,
      %133 = vector.extract_strided_slice %87 {offsets = [0, 96], sizes = [32, 32], strides = [1, 1]} : vector<32x384xf32> to vector<32x32xf32>
      %134 = arith.truncf %133 : vector<32x32xf32> to vector<32x32xbf16>
      %c3 = arith.constant 3 : index
      %c0_70 = arith.constant 0 : index
      %c0_71 = arith.constant 0 : index
      %135 = vector.load %arg10[%c3, %c0_70, %c0_71] : memref<4x32x32xbf16, #tpu.memory_space<vmem>>, vector<1x32x32xbf16>
      %136 = vector.shape_cast %135 : vector<1x32x32xbf16> to vector<32x32xbf16>
      %137 = vector.shape_cast %134 : vector<32x32xbf16> to vector<1x32x32xbf16>
      tpu.vector_store %arg10[%c3, %c0_70, %c0_71], %137 {strides = array<i32>} : memref<4x32x32xbf16, #tpu.memory_space<vmem>>, vector<1x32x32xbf16>,
      %138 = vector.extract_strided_slice %87 {offsets = [0, 224], sizes = [32, 32], strides = [1, 1]} : vector<32x384xf32> to vector<32x32xf32>
      %139 = arith.truncf %138 : vector<32x32xf32> to vector<32x32xbf16>
      %c3_72 = arith.constant 3 : index
      %c0_73 = arith.constant 0 : index
      %c0_74 = arith.constant 0 : index
      %140 = vector.load %arg11[%c3_72, %c0_73, %c0_74] : memref<4x32x32xbf16, #tpu.memory_space<vmem>>, vector<1x32x32xbf16>
      %141 = vector.shape_cast %140 : vector<1x32x32xbf16> to vector<32x32xbf16>
      %142 = vector.shape_cast %139 : vector<32x32xbf16> to vector<1x32x32xbf16>
      tpu.vector_store %arg11[%c3_72, %c0_73, %c0_74], %142 {strides = array<i32>} : memref<4x32x32xbf16, #tpu.memory_space<vmem>>, vector<1x32x32xbf16>,
      %143 = vector.extract_strided_slice %87 {offsets = [0, 352], sizes = [32, 32], strides = [1, 1]} : vector<32x384xf32> to vector<32x32xf32>
      %144 = arith.truncf %143 : vector<32x32xf32> to vector<32x32xbf16>
      %c3_75 = arith.constant 3 : index
      %c0_76 = arith.constant 0 : index
      %c0_77 = arith.constant 0 : index
      %145 = vector.load %arg12[%c3_75, %c0_76, %c0_77] : memref<4x32x32xbf16, #tpu.memory_space<vmem>>, vector<1x32x32xbf16>
      %146 = vector.shape_cast %145 : vector<1x32x32xbf16> to vector<32x32xbf16>
      %147 = vector.shape_cast %144 : vector<32x32xbf16> to vector<1x32x32xbf16>
      tpu.vector_store %arg12[%c3_75, %c0_76, %c0_77], %147 {strides = array<i32>} : memref<4x32x32xbf16, #tpu.memory_space<vmem>>, vector<1x32x32xbf16>,
    } else {
    }
    %c16_i32 = arith.constant 16 : i32
    %3 = arith.muli %arg1, %c16_i32 : i32
    %4 = tpu.assume_multiple %3, 16 : i32
    %c0 = arith.constant 0 : index
    %5 = arith.index_cast %4 : i32 to index
    %c0_1 = arith.constant 0 : index
    %6 = vector.load %arg10[%c0, %5, %c0_1] : memref<4x32x32xbf16, #tpu.memory_space<vmem>>, vector<4x16x32xbf16>
    %c0_2 = arith.constant 0 : index
    %c0_3 = arith.constant 0 : index
    %c0_4 = arith.constant 0 : index
    %7 = vector.load %arg11[%c0_2, %c0_3, %c0_4] : memref<4x32x32xbf16, #tpu.memory_space<vmem>>, vector<4x32x32xbf16>
    %c0_5 = arith.constant 0 : index
    %c0_6 = arith.constant 0 : index
    %c0_7 = arith.constant 0 : index
    %8 = vector.load %arg12[%c0_5, %c0_6, %c0_7] : memref<4x32x32xbf16, #tpu.memory_space<vmem>>, vector<4x32x32xbf16>
    "tpu.trace_start"() <{level = 10 : i32, message = "hqd,hkd->hqk"}> : () -> ()
    %cst = arith.constant dense<0.000000e+00> : vector<4x16x32xf32>
    %9 = tpu.matmul %6, %7, %cst {dimension_numbers = #tpu.dot_dimension_numbers<[2], [2], [1], [1], [0, 0, 0, 1, 1, 1], [0], [0]>} : vector<4x16x32xbf16>, vector<4x32x32xbf16>, vector<4x16x32xf32> -> vector<4x16x32xf32>
    "tpu.trace_stop"() : () -> ()
    %cst_8 = arith.constant dense<0xFF800000> : vector<4x16xf32>
    %10 = vector.multi_reduction <maximumf>, %9, %cst_8 [2] : vector<4x16x32xf32> to vector<4x16xf32>
    %11 = vector.shape_cast %10 : vector<4x16xf32> to vector<4x16x1xf32>
    %12 = vector.broadcast %11 : vector<4x16x1xf32> to vector<4x16x32xf32>
    %13 = arith.subf %9, %12 : vector<4x16x32xf32>
    %14 = math.exp %13 : vector<4x16x32xf32>
    %cst_9 = arith.constant dense<0.000000e+00> : vector<4x16xf32>
    %15 = vector.multi_reduction <add>, %14, %cst_9 [2] : vector<4x16x32xf32> to vector<4x16xf32>
    %16 = vector.shape_cast %15 : vector<4x16xf32> to vector<4x16x1xf32>
    %17 = arith.truncf %14 : vector<4x16x32xf32> to vector<4x16x32xbf16>
    "tpu.trace_start"() <{level = 10 : i32, message = "hqk,hkd->hqd"}> : () -> ()
    %cst_10 = arith.constant dense<0.000000e+00> : vector<4x16x32xf32>
    %18 = tpu.matmul %17, %8, %cst_10 {dimension_numbers = #tpu.dot_dimension_numbers<[2], [1], [1], [2], [0, 0, 0, 1, 1, 2], [0], [0]>} : vector<4x16x32xbf16>, vector<4x32x32xbf16>, vector<4x16x32xf32> -> vector<4x16x32xf32>
    "tpu.trace_stop"() : () -> ()
    %19 = tpu.reciprocal %16 {approx = true} : vector<4x16x1xf32> -> vector<4x16x1xf32>
    %20 = vector.broadcast %19 : vector<4x16x1xf32> to vector<4x16x32xf32>
    %21 = arith.mulf %18, %20 : vector<4x16x32xf32>
    %22 = arith.truncf %21 : vector<4x16x32xf32> to vector<4x16x32xbf16>
    %23 = vector.extract_strided_slice %22 {offsets = [0, 0, 0], sizes = [1, 16, 32], strides = [1, 1, 1]} : vector<4x16x32xbf16> to vector<1x16x32xbf16>
    %24 = vector.shape_cast %23 : vector<1x16x32xbf16> to vector<16x32xbf16>
    %c0_11 = arith.constant 0 : index
    %c0_12 = arith.constant 0 : index
    %25 = vector.load %arg13[%c0_11, %c0_12] : memref<16x128xbf16, #tpu.memory_space<vmem>>, vector<16x32xbf16>
    tpu.vector_store %arg13[%c0_11, %c0_12], %24 {strides = array<i32>} : memref<16x128xbf16, #tpu.memory_space<vmem>>, vector<16x32xbf16>,
    %26 = vector.extract_strided_slice %22 {offsets = [1, 0, 0], sizes = [1, 16, 32], strides = [1, 1, 1]} : vector<4x16x32xbf16> to vector<1x16x32xbf16>
    %27 = vector.shape_cast %26 : vector<1x16x32xbf16> to vector<16x32xbf16>
    %c0_13 = arith.constant 0 : index
    %c32 = arith.constant 32 : index
    %28 = vector.load %arg13[%c0_13, %c32] : memref<16x128xbf16, #tpu.memory_space<vmem>>, vector<16x32xbf16>
    tpu.vector_store %arg13[%c0_13, %c32], %27 {strides = array<i32>} : memref<16x128xbf16, #tpu.memory_space<vmem>>, vector<16x32xbf16>,
    %29 = vector.extract_strided_slice %22 {offsets = [2, 0, 0], sizes = [1, 16, 32], strides = [1, 1, 1]} : vector<4x16x32xbf16> to vector<1x16x32xbf16>
    %30 = vector.shape_cast %29 : vector<1x16x32xbf16> to vector<16x32xbf16>
    %c0_14 = arith.constant 0 : index
    %c64 = arith.constant 64 : index
    %31 = vector.load %arg13[%c0_14, %c64] : memref<16x128xbf16, #tpu.memory_space<vmem>>, vector<16x32xbf16>
    tpu.vector_store %arg13[%c0_14, %c64], %30 {strides = array<i32>} : memref<16x128xbf16, #tpu.memory_space<vmem>>, vector<16x32xbf16>,
    %32 = vector.extract_strided_slice %22 {offsets = [3, 0, 0], sizes = [1, 16, 32], strides = [1, 1, 1]} : vector<4x16x32xbf16> to vector<1x16x32xbf16>
    %33 = vector.shape_cast %32 : vector<1x16x32xbf16> to vector<16x32xbf16>
    %c0_15 = arith.constant 0 : index
    %c96 = arith.constant 96 : index
    %34 = vector.load %arg13[%c0_15, %c96] : memref<16x128xbf16, #tpu.memory_space<vmem>>, vector<16x32xbf16>
    tpu.vector_store %arg13[%c0_15, %c96], %33 {strides = array<i32>} : memref<16x128xbf16, #tpu.memory_space<vmem>>, vector<16x32xbf16>,
    %c0_16 = arith.constant 0 : index
    %c0_17 = arith.constant 0 : index
    %35 = vector.load %arg13[%c0_16, %c0_17] : memref<16x128xbf16, #tpu.memory_space<vmem>>, vector<16x128xbf16>
    %c0_18 = arith.constant 0 : index
    %c0_19 = arith.constant 0 : index
    %36 = vector.load %arg5[%c0_18, %c0_19] : memref<128x128xbf16, #tpu.memory_space<vmem>>, vector<128x128xbf16>
    %cst_20 = arith.constant dense<0.000000e+00> : vector<16x128xf32>
    %37 = tpu.matmul %35, %36, %cst_20 {dimension_numbers = #tpu.dot_dimension_numbers<[1], [0], [0], [1], [0, 0, 1, 1], [], []>} : vector<16x128xbf16>, vector<128x128xbf16>, vector<16x128xf32> -> vector<16x128xf32>
    %c0_21 = arith.constant 0 : index
    %c0_22 = arith.constant 0 : index
    %38 = vector.load %arg6[%c0_21, %c0_22] : memref<1x128xf32, #tpu.memory_space<vmem>>, vector<1x128xf32>
    %39 = vector.shape_cast %38 : vector<1x128xf32> to vector<128xf32>
    %40 = vector.shape_cast %39 : vector<128xf32> to vector<1x128xf32>
    %41 = vector.broadcast %40 : vector<1x128xf32> to vector<16x128xf32>
    %42 = arith.addf %37, %41 : vector<16x128xf32>
    %c0_23 = arith.constant 0 : index
    %43 = arith.index_cast %4 : i32 to index
    %c0_24 = arith.constant 0 : index
    %44 = vector.load %arg2[%c0_23, %43, %c0_24] : memref<1x32x128xf32, #tpu.memory_space<vmem>>, vector<1x16x128xf32>
    %45 = vector.shape_cast %44 : vector<1x16x128xf32> to vector<16x128xf32>
    %46 = arith.addf %45, %42 : vector<16x128xf32>
    %cst_25 = arith.constant dense<0.000000e+00> : vector<16xf32>
    %47 = vector.multi_reduction <add>, %46, %cst_25 [1] : vector<16x128xf32> to vector<16xf32>
    %48 = vector.shape_cast %47 : vector<16xf32> to vector<16x1xf32>
    %cst_26 = arith.constant 1.280000e+02 : f32
    %49 = vector.broadcast %cst_26 : f32 to vector<16x1xf32>
    %50 = arith.divf %48, %49 : vector<16x1xf32>
    %51 = vector.broadcast %50 : vector<16x1xf32> to vector<16x128xf32>
    %52 = arith.subf %46, %51 : vector<16x128xf32>
    %53 = arith.mulf %52, %52 : vector<16x128xf32>
    %cst_27 = arith.constant dense<0.000000e+00> : vector<16xf32>
    %54 = vector.multi_reduction <add>, %53, %cst_27 [1] : vector<16x128xf32> to vector<16xf32>
    %55 = vector.shape_cast %54 : vector<16xf32> to vector<16x1xf32>
    %cst_28 = arith.constant 1.280000e+02 : f32
    %56 = vector.broadcast %cst_28 : f32 to vector<16x1xf32>
    %57 = arith.divf %55, %56 : vector<16x1xf32>
    %58 = vector.broadcast %50 : vector<16x1xf32> to vector<16x128xf32>
    %59 = arith.subf %46, %58 : vector<16x128xf32>
    %cst_29 = arith.constant 9.99999974E-6 : f32
    %60 = vector.broadcast %cst_29 : f32 to vector<16x1xf32>
    %61 = arith.addf %57, %60 : vector<16x1xf32>
    %62 = math.rsqrt %61 : vector<16x1xf32>
    %63 = vector.broadcast %62 : vector<16x1xf32> to vector<16x128xf32>
    %64 = arith.mulf %59, %63 : vector<16x128xf32>
    %c0_30 = arith.constant 0 : index
    %c0_31 = arith.constant 0 : index
    %65 = vector.load %arg7[%c0_30, %c0_31] : memref<1x128xf32, #tpu.memory_space<vmem>>, vector<1x128xf32>
    %66 = vector.shape_cast %65 : vector<1x128xf32> to vector<128xf32>
    %67 = vector.shape_cast %66 : vector<128xf32> to vector<1x128xf32>
    %68 = vector.broadcast %67 : vector<1x128xf32> to vector<16x128xf32>
    %69 = arith.mulf %64, %68 : vector<16x128xf32>
    %c0_32 = arith.constant 0 : index
    %c0_33 = arith.constant 0 : index
    %70 = vector.load %arg8[%c0_32, %c0_33] : memref<1x128xf32, #tpu.memory_space<vmem>>, vector<1x128xf32>
    %71 = vector.shape_cast %70 : vector<1x128xf32> to vector<128xf32>
    %72 = vector.shape_cast %71 : vector<128xf32> to vector<1x128xf32>
    %73 = vector.broadcast %72 : vector<1x128xf32> to vector<16x128xf32>
    %74 = arith.addf %69, %73 : vector<16x128xf32>
    %c0_34 = arith.constant 0 : index
    %c0_35 = arith.constant 0 : index
    %c0_36 = arith.constant 0 : index
    %75 = vector.load %arg9[%c0_34, %c0_35, %c0_36] : memref<1x16x128xf32, #tpu.memory_space<vmem>>, vector<1x16x128xf32>
    %76 = vector.shape_cast %75 : vector<1x16x128xf32> to vector<16x128xf32>
    %77 = vector.shape_cast %74 : vector<16x128xf32> to vector<1x16x128xf32>
    tpu.vector_store %arg9[%c0_34, %c0_35, %c0_36], %77 {strides = array<i32>} : memref<1x16x128xf32, #tpu.memory_space<vmem>>, vector<1x16x128xf32>,
    return
  }
  func.func @transform_0(%arg0: i32, %arg1: i32) -> (i32, i32, i32) {
    %c0_i32 = arith.constant 0 : i32
    %c0_i32_0 = arith.constant 0 : i32
    %c0_i32_1 = arith.constant 0 : i32
    return %arg0, %c0_i32, %c0_i32_0 : i32, i32, i32
  }
  func.func @transform_1(%arg0: i32, %arg1: i32) -> (i32, i32) {
    %c0_i32 = arith.constant 0 : i32
    %c0_i32_0 = arith.constant 0 : i32
    %c0_i32_1 = arith.constant 0 : i32
    return %c0_i32, %c0_i32_0 : i32, i32
  }
  func.func @transform_2(%arg0: i32, %arg1: i32) -> (i32, i32) {
    %c0_i32 = arith.constant 0 : i32
    %c0_i32_0 = arith.constant 0 : i32
    %c0_i32_1 = arith.constant 0 : i32
    return %c0_i32, %c0_i32_0 : i32, i32
  }
  func.func @transform_3(%arg0: i32, %arg1: i32) -> (i32, i32) {
    %c0_i32 = arith.constant 0 : i32
    %c0_i32_0 = arith.constant 0 : i32
    %c0_i32_1 = arith.constant 0 : i32
    return %c0_i32, %c0_i32_0 : i32, i32
  }
  func.func @transform_4(%arg0: i32, %arg1: i32) -> (i32, i32) {
    %c0_i32 = arith.constant 0 : i32
    %c0_i32_0 = arith.constant 0 : i32
    %c0_i32_1 = arith.constant 0 : i32
    return %c0_i32, %c0_i32_0 : i32, i32
  }
  func.func @transform_5(%arg0: i32, %arg1: i32) -> (i32, i32) {
    %c0_i32 = arith.constant 0 : i32
    %c0_i32_0 = arith.constant 0 : i32
    %c0_i32_1 = arith.constant 0 : i32
    return %c0_i32, %c0_i32_0 : i32, i32
  }
  func.func @transform_6(%arg0: i32, %arg1: i32) -> (i32, i32) {
    %c0_i32 = arith.constant 0 : i32
    %c0_i32_0 = arith.constant 0 : i32
    %c0_i32_1 = arith.constant 0 : i32
    return %c0_i32, %c0_i32_0 : i32, i32
  }
  func.func @transform_7(%arg0: i32, %arg1: i32) -> (i32, i32, i32) {
    %c0_i32 = arith.constant 0 : i32
    %c0_i32_0 = arith.constant 0 : i32
    return %arg0, %arg1, %c0_i32 : i32, i32, i32
  }
}

</mosaic_0001>

<llo_original>
// kernel: tpu_custom_call.1
$region0: #{tpu_custom_call.1}
  #allocation0 [shape = 'u32[]', space=smem, size = 0x4, offset = 0x4, fixed_abs, tag = 'smem constant byte address 0x4 - core index']
  #allocation1 [shape = 'u32[144,128]{1,0:T(1,128)}', space=vmem, size = 0x12000, scoped, tag = 'internal scratch']
  #allocation2 [shape = 'bf16[4,32,32]{2,1,0:T(16,128)(2,1)}', space=vmem, size = 0x8000, scoped, tag = 'scratch operand']
  #allocation3 [shape = 'bf16[4,32,32]{2,1,0:T(16,128)(2,1)}', space=vmem, size = 0x8000, scoped, tag = 'scratch operand']
  #allocation4 [shape = 'bf16[4,32,32]{2,1,0:T(16,128)(2,1)}', space=vmem, size = 0x8000, scoped, tag = 'scratch operand']
  #allocation5 [shape = 'bf16[16,128]{1,0:T(16,128)(2,1)}', space=vmem, size = 0x1000, scoped, tag = 'scratch operand']
  %s0 = inlined_call_operand.hbm [shape: f32[2,32,128], index: 0, kind: input, shape index: {}]
  %s1 = inlined_call_operand.hbm [shape: bf16[128,384], index: 1, kind: input, shape index: {}]
  %s2 = inlined_call_operand.vmem [shape: f32[1,384], index: 2, kind: input, shape index: {}]
  %s3 = inlined_call_operand.hbm [shape: bf16[128,128], index: 3, kind: input, shape index: {}]
  %s4 = inlined_call_operand.vmem [shape: f32[1,128], index: 4, kind: input, shape index: {}]
  %s5 = inlined_call_operand.vmem [shape: f32[1,128], index: 5, kind: input, shape index: {}]
  %s6 = inlined_call_operand.vmem [shape: f32[1,128], index: 6, kind: input, shape index: {}]
  %s7 = inlined_call_operand.hbm [shape: f32[2,32,128], index: 7, kind: output, shape index: {}]
  %s8 = sld [smem:[#allocation0]]
  $region77: #{tpu_custom_call.1} parent=0
    _
  %s10 = ssub.s32 1, %s8
  %s11 = scalar_select 0, %s10, %s8
  $region1: #{tpu_custom_call.1} parent=0
    #allocation6 [shape = 'u8[32768]{0}', space=vmem, size = 0x8000, scoped, tag = 'input window, operand 0']
    #allocation7 [shape = 's32[2]{0}', space=sflag, size = 0x8, scoped, tag = 'scoped memory for tpu_custom_call.1']
    #allocation8 [shape = 's32[2]{0}', space=sflag, size = 0x8, scoped, tag = 'scoped memory for tpu_custom_call.1']
    #allocation9 [shape = 'u8[98304]{0}', space=vmem, size = 0x18000, scoped, tag = 'input window, operand 1, single buffered']
    #allocation10 [shape = 's32[1]{0}', space=sflag, size = 0x4, scoped, tag = 'scoped memory for tpu_custom_call.1']
    #allocation11 [shape = 'u8[32768]{0}', space=vmem, size = 0x8000, scoped, tag = 'input window, operand 3, single buffered']
    #allocation12 [shape = 'u8[16384]{0}', space=vmem, size = 0x4000, scoped, tag = 'output window, operand 0']
    %12 = vsyncpa [#allocation7], 0
    %s13 = scalar_lea.sflag [#allocation7], 1
    %14 = vsyncpa %s13, 0
    %15 = vsyncpa [#allocation10], 0
    %16 = vsyncpa [#allocation8], 0
    %s17 = scalar_lea.sflag [#allocation8], 1
    %18 = vsyncpa %s17, 0
    loop: start=0, step=1, limit=6
    $region2: #{tpu_custom_call.1} parent=1 // loop_pre_header
      _
    $region3: #{tpu_custom_call.1} parent=1 // loop_header
      %s20 = sphi 0, %s24
      %p21 = scmp.ge.s32.totalorder %s20, 6
      %s27 = sphi 0, %s39
      %s28 = sphi 0, %s35
      %s29 = sphi 0, %s27
      %s30 = sphi 0, %s28
      %s31 = sphi 0, %s29
      %s32 = sphi 0, %s30
      %s42 = sphi 0, %s44
      %s45 = sphi 0, %s42
      %s46 = sphi 0, %s45
      %s62 = sphi 0, %s46
      %s66 = sphi 0, %s66
      %s68 = sphi 0, %s66
      %s69 = sphi 0, %s68
      %s83 = sphi 0, %s69
      %s87 = sphi 0, %s87
      %s89 = sphi 0, %s87
      %s90 = sphi 0, %s89
      %s104 = sphi 0, %s90
      %s108 = sphi 0, %s108
      %s110 = sphi 0, %s108
      %s111 = sphi 0, %s110
      %s125 = sphi 0, %s111
      %s129 = sphi 0, %s129
      %s131 = sphi 0, %s129
      %s132 = sphi 0, %s131
      %s146 = sphi 0, %s132
      %s150 = sphi 0, %s150
      %s152 = sphi 0, %s150
      %s153 = sphi 0, %s152
      %s167 = sphi 0, %s153
      %s171 = sphi 0, %s171
      %s173 = sphi 0, %s171
      %s174 = sphi 0, %s173
      %s188 = sphi 0, %s174
      %s196 = sphi 0, %s198
      %s199 = sphi 0, %s196
      %s200 = sphi 0, %s199
      %s216 = sphi 0, %s200
    $region4: #{tpu_custom_call.1} parent=1 // loop_header_branch
      %23 = sbr.rel (%p21) target = $region8
    $region5: #{tpu_custom_call.1} parent=1 // loop_body
      %s25 = ssub.s32 %s20, 1
      %s26 = ssub.s32 %s20, 2
      %s33 = sadd.s32 1, %s28
      %p34 = scmp.ge.s32.totalorder %s33, 2
      %s35 = scalar_select %p34, 0, %s33
      %s36 = sadd.s32 1, %s27
      %s37 = scalar_select %p34, %s36, %s27
      %p38 = scmp.ge.s32.totalorder %s37, 2
      %s39 = scalar_select %p38, 0, %s37
      %s40 = ssub.s32 %s27, %s39
      %p41 = scmp.eq.s32.totalorder %s40, 0
      %s43 = sadd.s32 %s42, 1
      %s44 = scalar_select %p41, %s42, %s43
      %p47 = pneg %p41
      %p48 = scmp.eq.s32.totalorder %s20, 3
      %p49 = por %p47, %p48
      %p50 = scmp.ne.s32.totalorder %s42, %s45
      %p51 = scmp.eq.s32.totalorder %s20, 0
      %p52 = por %p50, %p51
      %p53 = scmp.ne.s32.totalorder %s42, %s45
      %p54 = scmp.eq.s32.totalorder %s25, 3
      %p55 = por %p53, %p54
      %p56 = scmp.ne.s32.totalorder %s45, %s46
      %p57 = scmp.eq.s32.totalorder %s25, 0
      %p58 = por %p56, %p57
      %p59 = scmp.ne.s32.totalorder %s45, %s46
      %p60 = scmp.eq.s32.totalorder %s26, 3
      %p61 = por %p59, %p60
      %p63 = scmp.ne.s32.totalorder %s46, %s62
      %p64 = scmp.eq.s32.totalorder %s26, 0
      %p65 = por %p63, %p64
      %s67 = sadd.s32 %s66, 1
      %p70 = scmp.eq.s32.totalorder %s20, 3
      %p71 = scmp.ne.s32.totalorder %s66, %s68
      %p72 = scmp.eq.s32.totalorder %s20, 0
      %p73 = por %p71, %p72
      %p74 = scmp.ne.s32.totalorder %s66, %s68
      %p75 = scmp.eq.s32.totalorder %s25, 3
      %p76 = por %p74, %p75
      %p77 = scmp.ne.s32.totalorder %s68, %s69
      %p78 = scmp.eq.s32.totalorder %s25, 0
      %p79 = por %p77, %p78
      %p80 = scmp.ne.s32.totalorder %s68, %s69
      %p81 = scmp.eq.s32.totalorder %s26, 3
      %p82 = por %p80, %p81
      %p84 = scmp.ne.s32.totalorder %s69, %s83
      %p85 = scmp.eq.s32.totalorder %s26, 0
      %p86 = por %p84, %p85
      %s88 = sadd.s32 %s87, 1
      %p91 = scmp.eq.s32.totalorder %s20, 3
      %p92 = scmp.ne.s32.totalorder %s87, %s89
      %p93 = scmp.eq.s32.totalorder %s20, 0
      %p94 = por %p92, %p93
      %p95 = scmp.ne.s32.totalorder %s87, %s89
      %p96 = scmp.eq.s32.totalorder %s25, 3
      %p97 = por %p95, %p96
      %p98 = scmp.ne.s32.totalorder %s89, %s90
      %p99 = scmp.eq.s32.totalorder %s25, 0
      %p100 = por %p98, %p99
      %p101 = scmp.ne.s32.totalorder %s89, %s90
      %p102 = scmp.eq.s32.totalorder %s26, 3
      %p103 = por %p101, %p102
      %p105 = scmp.ne.s32.totalorder %s90, %s104
      %p106 = scmp.eq.s32.totalorder %s26, 0
      %p107 = por %p105, %p106
      %s109 = sadd.s32 %s108, 1
      %p112 = scmp.eq.s32.totalorder %s20, 3
      %p113 = scmp.ne.s32.totalorder %s108, %s110
      %p114 = scmp.eq.s32.totalorder %s20, 0
      %p115 = por %p113, %p114
      %p116 = scmp.ne.s32.totalorder %s108, %s110
      %p117 = scmp.eq.s32.totalorder %s25, 3
      %p118 = por %p116, %p117
      %p119 = scmp.ne.s32.totalorder %s110, %s111
      %p120 = scmp.eq.s32.totalorder %s25, 0
      %p121 = por %p119, %p120
      %p122 = scmp.ne.s32.totalorder %s110, %s111
      %p123 = scmp.eq.s32.totalorder %s26, 3
      %p124 = por %p122, %p123
      %p126 = scmp.ne.s32.totalorder %s111, %s125
      %p127 = scmp.eq.s32.totalorder %s26, 0
      %p128 = por %p126, %p127
      %s130 = sadd.s32 %s129, 1
      %p133 = scmp.eq.s32.totalorder %s20, 3
      %p134 = scmp.ne.s32.totalorder %s129, %s131
      %p135 = scmp.eq.s32.totalorder %s20, 0
      %p136 = por %p134, %p135
      %p137 = scmp.ne.s32.totalorder %s129, %s131
      %p138 = scmp.eq.s32.totalorder %s25, 3
      %p139 = por %p137, %p138
      %p140 = scmp.ne.s32.totalorder %s131, %s132
      %p141 = scmp.eq.s32.totalorder %s25, 0
      %p142 = por %p140, %p141
      %p143 = scmp.ne.s32.totalorder %s131, %s132
      %p144 = scmp.eq.s32.totalorder %s26, 3
      %p145 = por %p143, %p144
      %p147 = scmp.ne.s32.totalorder %s132, %s146
      %p148 = scmp.eq.s32.totalorder %s26, 0
      %p149 = por %p147, %p148
      %s151 = sadd.s32 %s150, 1
      %p154 = scmp.eq.s32.totalorder %s20, 3
      %p155 = scmp.ne.s32.totalorder %s150, %s152
      %p156 = scmp.eq.s32.totalorder %s20, 0
      %p157 = por %p155, %p156
      %p158 = scmp.ne.s32.totalorder %s150, %s152
      %p159 = scmp.eq.s32.totalorder %s25, 3
      %p160 = por %p158, %p159
      %p161 = scmp.ne.s32.totalorder %s152, %s153
      %p162 = scmp.eq.s32.totalorder %s25, 0
      %p163 = por %p161, %p162
      %p164 = scmp.ne.s32.totalorder %s152, %s153
      %p165 = scmp.eq.s32.totalorder %s26, 3
      %p166 = por %p164, %p165
      %p168 = scmp.ne.s32.totalorder %s153, %s167
      %p169 = scmp.eq.s32.totalorder %s26, 0
      %p170 = por %p168, %p169
      %s172 = sadd.s32 %s171, 1
      %p175 = scmp.eq.s32.totalorder %s20, 3
      %p176 = scmp.ne.s32.totalorder %s171, %s173
      %p177 = scmp.eq.s32.totalorder %s20, 0
      %p178 = por %p176, %p177
      %p179 = scmp.ne.s32.totalorder %s171, %s173
      %p180 = scmp.eq.s32.totalorder %s25, 3
      %p181 = por %p179, %p180
      %p182 = scmp.ne.s32.totalorder %s173, %s174
      %p183 = scmp.eq.s32.totalorder %s25, 0
      %p184 = por %p182, %p183
      %p185 = scmp.ne.s32.totalorder %s173, %s174
      %p186 = scmp.eq.s32.totalorder %s26, 3
      %p187 = por %p185, %p186
      %p189 = scmp.ne.s32.totalorder %s174, %s188
      %p190 = scmp.eq.s32.totalorder %s26, 0
      %p191 = por %p189, %p190
      %s192 = ssub.s32 %s27, %s39
      %s193 = ssub.s32 %s28, %s35
      %s194 = sor.u32 %s192, %s193
      %p195 = scmp.eq.s32.totalorder %s194, 0
      %s197 = sadd.s32 %s196, 1
      %s198 = scalar_select %p195, %s196, %s197
      %p201 = pneg %p195
      %p202 = scmp.eq.s32.totalorder %s20, 3
      %p203 = por %p201, %p202
      %p204 = scmp.ne.s32.totalorder %s196, %s199
      %p205 = scmp.eq.s32.totalorder %s20, 0
      %p206 = por %p204, %p205
      %p207 = scmp.ne.s32.totalorder %s196, %s199
      %p208 = scmp.eq.s32.totalorder %s25, 3
      %p209 = por %p207, %p208
      %p210 = scmp.ne.s32.totalorder %s199, %s200
      %p211 = scmp.eq.s32.totalorder %s25, 0
      %p212 = por %p210, %p211
      %p213 = scmp.ne.s32.totalorder %s199, %s200
      %p214 = scmp.eq.s32.totalorder %s26, 3
      %p215 = por %p213, %p214
      %p217 = scmp.ne.s32.totalorder %s200, %s216
      %p218 = scmp.eq.s32.totalorder %s26, 0
      %p219 = por %p217, %p218
      %p220 = scmp.le.s32.totalorder 1, %s20
      %p221 = scmp.lt.s32.totalorder %s20, 5
      %p222 = pnand %p220, %p221
      %p223 = pneg %p222
      // Predicated region
      $region9: #{tpu_custom_call.1} parent=5 // pred_check
        _
      $region10: #{tpu_custom_call.1} parent=5 // pred_check_branch
        %225 = sbr.rel (%p222) target = $region12
      $region11: #{tpu_custom_call.1} parent=5 // pred_region
        %s226 = ssub.s32 %s20, 1
        // Predicated region
        $region13: #{tpu_custom_call.1} parent=11 // pred_check
          %p227 = pneg %p79
        $region14: #{tpu_custom_call.1} parent=11 // pred_check_branch
          %229 = sbr.rel (%p227) target = $region16
        $region15: #{tpu_custom_call.1} parent=11 // pred_region
          %s231 = ssub.s32 3072, 3072
          %232 = vsyncadd [#allocation10], %s231
          %s233 = sshll.u32 [#allocation9], 4
          %s234 = int_to_ptr.vmem [resolvable:$true] %s233
          %239 = dma.hbm_to_vmem [thread:$0]  %s1, 3072, %s234, [#allocation10], 192, 192, 12
        $region16: #{tpu_custom_call.1} parent=11 // pred_fallthru
          _
        // Predicated region
        $region17: #{tpu_custom_call.1} parent=11 // pred_check
          %p240 = pneg %p100
        $region18: #{tpu_custom_call.1} parent=11 // pred_check_branch
          %242 = sbr.rel (%p240) target = $region20
        $region19: #{tpu_custom_call.1} parent=11 // pred_region
          _
        $region20: #{tpu_custom_call.1} parent=11 // pred_fallthru
          _
        // Predicated region
        $region21: #{tpu_custom_call.1} parent=11 // pred_check
          %p243 = pneg %p121
        $region22: #{tpu_custom_call.1} parent=11 // pred_check_branch
          %245 = sbr.rel (%p243) target = $region24
        $region23: #{tpu_custom_call.1} parent=11 // pred_region
          %s247 = ssub.s32 1024, 1024
          %248 = vsyncadd [#allocation10], %s247
          %s249 = sshll.u32 [#allocation11], 4
          %s250 = int_to_ptr.vmem [resolvable:$true] %s249
          %255 = dma.hbm_to_vmem [thread:$0]  %s3, 1024, %s250, [#allocation10], 64, 64, 4
        $region24: #{tpu_custom_call.1} parent=11 // pred_fallthru
          _
        // Predicated region
        $region25: #{tpu_custom_call.1} parent=11 // pred_check
          %p256 = pneg %p142
        $region26: #{tpu_custom_call.1} parent=11 // pred_check_branch
          %258 = sbr.rel (%p256) target = $region28
        $region27: #{tpu_custom_call.1} parent=11 // pred_region
          _
        $region28: #{tpu_custom_call.1} parent=11 // pred_fallthru
          _
        // Predicated region
        $region29: #{tpu_custom_call.1} parent=11 // pred_check
          %p259 = pneg %p163
        $region30: #{tpu_custom_call.1} parent=11 // pred_check_branch
          %261 = sbr.rel (%p259) target = $region32
        $region31: #{tpu_custom_call.1} parent=11 // pred_region
          _
        $region32: #{tpu_custom_call.1} parent=11 // pred_fallthru
          _
        // Predicated region
        $region33: #{tpu_custom_call.1} parent=11 // pred_check
          %p262 = pneg %p184
        $region34: #{tpu_custom_call.1} parent=11 // pred_check_branch
          %264 = sbr.rel (%p262) target = $region36
        $region35: #{tpu_custom_call.1} parent=11 // pred_region
          _
        $region36: #{tpu_custom_call.1} parent=11 // pred_fallthru
          _
      $region12: #{tpu_custom_call.1} parent=5 // pred_fallthru
        _
      %p265 = scmp.lt.s32.totalorder %s20, 4
      // Predicated region
      $region37: #{tpu_custom_call.1} parent=5 // pred_check
        %p266 = pneg %p265
      $region38: #{tpu_custom_call.1} parent=5 // pred_check_branch
        %268 = sbr.rel (%p266) target = $region40
      $region39: #{tpu_custom_call.1} parent=5 // pred_region
        // Predicated region
        $region41: #{tpu_custom_call.1} parent=39 // pred_check
          %p269 = pneg %p52
        $region42: #{tpu_custom_call.1} parent=39 // pred_check_branch
          %271 = sbr.rel (%p269) target = $region44
        $region43: #{tpu_custom_call.1} parent=39 // pred_region
          %s272 = sand.u32 %s42, 1
          %s273 = scalar_lea.sflag [#allocation7], %s272
          %s274 = sand.u32 %s42, 1
          %s275 = smul.addr %s274, 32
          %s276 = scalar_lea.vmem [#allocation6], %s275
          %s278 = ssub.s32 512, 512
          %279 = vsyncadd %s273, %s278
          %s280 = smul.addr %s27, 4
          %s281 = smul.addr %s280, 128
          %s282 = scalar_lea.hbm %s0, %s281
          %s283 = sshll.u32 %s276, 4
          %s284 = int_to_ptr.vmem [resolvable:$true] %s283
          %289 = dma.hbm_to_vmem [thread:$0]  %s282, 512, %s284, %s273, 128, 128, 8
        $region44: #{tpu_custom_call.1} parent=39 // pred_fallthru
          _
      $region40: #{tpu_custom_call.1} parent=5 // pred_fallthru
        _
      %p290 = scmp.le.s32.totalorder 1, %s20
      %p291 = scmp.lt.s32.totalorder %s20, 5
      %p292 = pnand %p290, %p291
      %p293 = pneg %p292
      // Predicated region
      $region45: #{tpu_custom_call.1} parent=5 // pred_check
        _
      $region46: #{tpu_custom_call.1} parent=5 // pred_check_branch
        %295 = sbr.rel (%p292) target = $region48
      $region47: #{tpu_custom_call.1} parent=5 // pred_region
        %s296 = ssub.s32 %s20, 1
        %s297 = sand.u32 %s45, 1
        %s298 = scalar_lea.sflag [#allocation7], %s297
        %s299 = sand.u32 %s45, 1
        %s300 = smul.addr %s299, 32
        %s301 = scalar_lea.vmem [#allocation6], %s300
        // Predicated region
        $region49: #{tpu_custom_call.1} parent=47 // pred_check
          %p302 = pneg %p58
        $region50: #{tpu_custom_call.1} parent=47 // pred_check_branch
          %304 = sbr.rel (%p302) target = $region52
        $region51: #{tpu_custom_call.1} parent=47 // pred_region
          %305 = dma.done %s298, 512
        $region52: #{tpu_custom_call.1} parent=47 // pred_fallthru
          _
        // Predicated region
        $region53: #{tpu_custom_call.1} parent=47 // pred_check
          %p306 = pneg %p79
        $region54: #{tpu_custom_call.1} parent=47 // pred_check_branch
          %308 = sbr.rel (%p306) target = $region56
        $region55: #{tpu_custom_call.1} parent=47 // pred_region
          %309 = dma.done [#allocation10], 3072
        $region56: #{tpu_custom_call.1} parent=47 // pred_fallthru
          _
        // Predicated region
        $region57: #{tpu_custom_call.1} parent=47 // pred_check
          %p310 = pneg %p121
        $region58: #{tpu_custom_call.1} parent=47 // pred_check_branch
          %312 = sbr.rel (%p310) target = $region60
        $region59: #{tpu_custom_call.1} parent=47 // pred_region
          %313 = dma.done [#allocation10], 1024
        $region60: #{tpu_custom_call.1} parent=47 // pred_fallthru
          _
        %s314 = sand.u32 %s45, 1
        %s315 = scalar_lea.sflag [#allocation7], %s314
        %s316 = sand.u32 %s45, 1
        %s317 = smul.addr %s316, 32
        %s318 = scalar_lea.vmem [#allocation6], %s317
        %p319 = pneg %p58
        %p320 = pneg %p55
        %p321 = pneg %p79
        %p322 = pneg %p76
        %p323 = pneg %p100
        %p324 = pneg %p97
        %p325 = pneg %p121
        %p326 = pneg %p118
        %p327 = pneg %p142
        %p328 = pneg %p139
        %p329 = pneg %p163
        %p330 = pneg %p160
        %p331 = pneg %p184
        %p332 = pneg %p181
        %p333 = pneg %p212
        %p334 = pneg %p209
        %s335 = sand.u32 %s199, 1
        %s336 = scalar_lea.sflag [#allocation8], %s335
        %s337 = sand.u32 %s199, 1
        %s338 = smul.addr %s337, 16
        %s339 = scalar_lea.vmem [#allocation12], %s338
        %s340 = smul.u32 2, %s30
        %p342 = scmp.eq.s32.totalorder %s30, 0
        // Predicated region
        $region61: #{tpu_custom_call.1} parent=47 // pred_check
          %p343 = pneg %p342
        $region62: #{tpu_custom_call.1} parent=47 // pred_check_branch
          %345 = sbr.rel (%p343) target = $region64
        $region63: #{tpu_custom_call.1} parent=47 // pred_region
          %v346 = vld [vmem:[%s2] sm:$0x7]
          %v347 = vld [vmem:[%s301] sm:$0xff]
          %v348 = vld [vmem:[%s301 + $0x8] sm:$0xff]
          %v349 = vld [vmem:[%s301 + $0x10] sm:$0xff]
          %v350 = vld [vmem:[%s301 + $0x18] sm:$0xff]
          %v351 = vpack.c.bf16 %v348, %v347
          %v352 = vpack.c.bf16 %v350, %v349
          %v353 = vld [vmem:[#allocation9] sm:$0xff]
          %v354 = vld [vmem:[#allocation9 + $0x8] sm:$0xf]
          %v355 = vld [vmem:[#allocation9 + $0xc] sm:$0xff]
          %v356 = vld [vmem:[#allocation9 + $0x14] sm:$0xf]
          %v357 = vld [vmem:[#allocation9 + $0x18] sm:$0xff]
          %v358 = vld [vmem:[#allocation9 + $0x20] sm:$0xf]
          %v359 = vld [vmem:[#allocation9 + $0x24] sm:$0xff]
          %v360 = vld [vmem:[#allocation9 + $0x2c] sm:$0xf]
          %v361 = vld [vmem:[#allocation9 + $0x30] sm:$0xff]
          %v362 = vld [vmem:[#allocation9 + $0x38] sm:$0xf]
          %v363 = vld [vmem:[#allocation9 + $0x3c] sm:$0xff]
          %v364 = vld [vmem:[#allocation9 + $0x44] sm:$0xf]
          %v365 = vld [vmem:[#allocation9 + $0x48] sm:$0xff]
          %v366 = vld [vmem:[#allocation9 + $0x50] sm:$0xf]
          %v367 = vld [vmem:[#allocation9 + $0x54] sm:$0xff]
          %v368 = vld [vmem:[#allocation9 + $0x5c] sm:$0xf]
          %v369 = vld [vmem:[#allocation9 + $0x60] sm:$0xff]
          %v370 = vld [vmem:[#allocation9 + $0x68] sm:$0xf]
          %v371 = vld [vmem:[#allocation9 + $0x6c] sm:$0xff]
          %v372 = vld [vmem:[#allocation9 + $0x74] sm:$0xf]
          %v373 = vld [vmem:[#allocation9 + $0x78] sm:$0xff]
          %v374 = vld [vmem:[#allocation9 + $0x80] sm:$0xf]
          %v375 = vld [vmem:[#allocation9 + $0x84] sm:$0xff]
          %v376 = vld [vmem:[#allocation9 + $0x8c] sm:$0xf]
          %v377 = vld [vmem:[#allocation9 + $0x90] sm:$0xff]
          %v378 = vld [vmem:[#allocation9 + $0x98] sm:$0xf]
          %v379 = vld [vmem:[#allocation9 + $0x9c] sm:$0xff]
          %v380 = vld [vmem:[#allocation9 + $0xa4] sm:$0xf]
          %v381 = vld [vmem:[#allocation9 + $0xa8] sm:$0xff]
          %v382 = vld [vmem:[#allocation9 + $0xb0] sm:$0xf]
          %v383 = vld [vmem:[#allocation9 + $0xb4] sm:$0xff]
          %v384 = vld [vmem:[#allocation9 + $0xbc] sm:$0xf]
          %v386 = vlaneseq
          %v387 = vshrl.u32 %v386, 7
          %v388 = vsub.s32 0, %v387
          %v389 = vrot.slane %v346, %v388
          %v390 = vlaneseq
          %v391 = vshrl.u32 %v390, 7
          %v392 = vsub.s32 1, %v391
          %v393 = vrot.slane %v346, %v392
          %v394 = vlaneseq
          %v395 = vshrl.u32 %v394, 7
          %v396 = vsub.s32 2, %v395
          %v397 = vrot.slane %v346, %v396
          %v433 = vunpack.c.l.b16 %v353
          %v434 = vunpack.c.h.b16 %v353
          %v435 = vunpack.c.l.b16 %v354
          %v436 = vunpack.c.l.b16 %v355
          %v437 = vunpack.c.h.b16 %v355
          %v438 = vunpack.c.l.b16 %v356
          %v439 = vunpack.c.l.b16 %v357
          %v440 = vunpack.c.h.b16 %v357
          %v441 = vunpack.c.l.b16 %v358
          %v442 = vunpack.c.l.b16 %v359
          %v443 = vunpack.c.h.b16 %v359
          %v444 = vunpack.c.l.b16 %v360
          %v445 = vunpack.c.l.b16 %v361
          %v446 = vunpack.c.h.b16 %v361
          %v447 = vunpack.c.l.b16 %v362
          %v448 = vunpack.c.l.b16 %v363
          %v449 = vunpack.c.h.b16 %v363
          %v450 = vunpack.c.l.b16 %v364
          %v451 = vunpack.c.l.b16 %v365
          %v452 = vunpack.c.h.b16 %v365
          %v453 = vunpack.c.l.b16 %v366
          %v454 = vunpack.c.l.b16 %v367
          %v455 = vunpack.c.h.b16 %v367
          %v456 = vunpack.c.l.b16 %v368
          %v457 = vunpack.c.l.b16 %v369
          %v458 = vunpack.c.h.b16 %v369
          %v459 = vunpack.c.l.b16 %v370
          %v460 = vunpack.c.l.b16 %v371
          %v461 = vunpack.c.h.b16 %v371
          %v462 = vunpack.c.l.b16 %v372
          %v463 = vunpack.c.l.b16 %v373
          %v464 = vunpack.c.h.b16 %v373
          %v465 = vunpack.c.l.b16 %v374
          %v466 = vunpack.c.l.b16 %v375
          %v467 = vunpack.c.h.b16 %v375
          %v468 = vunpack.c.l.b16 %v376
          %v469 = vunpack.c.l.b16 %v377
          %v470 = vunpack.c.h.b16 %v377
          %v471 = vunpack.c.l.b16 %v378
          %v472 = vunpack.c.l.b16 %v379
          %v473 = vunpack.c.h.b16 %v379
          %v474 = vunpack.c.l.b16 %v380
          %v475 = vunpack.c.l.b16 %v381
          %v476 = vunpack.c.h.b16 %v381
          %v477 = vunpack.c.l.b16 %v382
          %v478 = vunpack.c.l.b16 %v383
          %v479 = vunpack.c.h.b16 %v383
          %v480 = vunpack.c.l.b16 %v384
          %v481 = vpack.c.b16 %v436, %v433
          %v482 = vpack.c.b16 %v437, %v434
          %v483 = vpack.c.b16 %v438, %v435
          %v484 = vpack.c.b16 %v442, %v439
          %v485 = vpack.c.b16 %v443, %v440
          %v486 = vpack.c.b16 %v444, %v441
          %v487 = vpack.c.b16 %v448, %v445
          %v488 = vpack.c.b16 %v449, %v446
          %v489 = vpack.c.b16 %v450, %v447
          %v490 = vpack.c.b16 %v454, %v451
          %v491 = vpack.c.b16 %v455, %v452
          %v492 = vpack.c.b16 %v456, %v453
          %v493 = vpack.c.b16 %v460, %v457
          %v494 = vpack.c.b16 %v461, %v458
          %v495 = vpack.c.b16 %v462, %v459
          %v496 = vpack.c.b16 %v466, %v463
          %v497 = vpack.c.b16 %v467, %v464
          %v498 = vpack.c.b16 %v468, %v465
          %v499 = vpack.c.b16 %v472, %v469
          %v500 = vpack.c.b16 %v473, %v470
          %v501 = vpack.c.b16 %v474, %v471
          %v502 = vpack.c.b16 %v478, %v475
          %v503 = vpack.c.b16 %v479, %v476
          %v504 = vpack.c.b16 %v480, %v477
          %529 = vmatprep.subr.bf16.mxu0 %v482
          %530 = vmatpush1.bf16.msra.mxu0 %v481
          %531 = vmatprep.subr.bf16.mxu0 %v485
          %532 = vmatpush1.bf16.msra.mxu0 %v484
          %533 = vmatprep.subr.bf16.mxu0 %v488
          %534 = vmatpush1.bf16.msra.mxu0 %v487
          %535 = vmatprep.subr.bf16.mxu0 %v491
          %536 = vmatpush1.bf16.msra.mxu0 %v490
          %537 = vmatprep.subr.bf16.mxu0 %v494
          %538 = vmatpush1.bf16.msra.mxu0 %v493
          %539 = vmatprep.subr.bf16.mxu0 %v497
          %540 = vmatpush1.bf16.msra.mxu0 %v496
          %541 = vmatprep.subr.bf16.mxu0 %v500
          %542 = vmatpush1.bf16.msra.mxu0 %v499
          %543 = vmatprep.subr.bf16.mxu0 %v503
          %544 = vmatpush1.bf16.msra.mxu0 %v502
          %545 = vmatprep.subr.bf16.mxu0 0
          %546 = vmatpush1.bf16.msra.mxu0 0
          %547 = vmatprep.subr.bf16.mxu0 0
          %548 = vmatpush1.bf16.msra.mxu0 0
          %549 = vmatprep.subr.bf16.mxu0 0
          %550 = vmatpush1.bf16.msra.mxu0 0
          %551 = vmatprep.subr.bf16.mxu0 0
          %552 = vmatpush1.bf16.msra.mxu0 0
          %553 = vmatprep.subr.bf16.mxu0 0
          %554 = vmatpush1.bf16.msra.mxu0 0
          %555 = vmatprep.subr.bf16.mxu0 0
          %556 = vmatpush1.bf16.msra.mxu0 0
          %557 = vmatprep.subr.bf16.mxu0 0
          %558 = vmatpush1.bf16.msra.mxu0 0
          %559 = vmatprep.subr.bf16.mxu0 0
          %560 = vmatpush1.bf16.msra.mxu0 0
          %561 = vmatprep.mubr.bf16.mxu0 0
          %562 = vmatmul.mubr.bf16.gmra.mrb[0].mxu0 %v351
          %v563 = vpop.f32.mrb[0].mxu0
          %v564 = vadd.f32 %v389, %v563
          %v565 = vpop.f32.mrb[0].mxu0
          %v566 = vadd.f32 %v393, %v565
          %v567 = vpop.f32.mrb[0].mxu0
          %v568 = vadd.f32 %v389, %v567
          %v569 = vpop.f32.mrb[0].mxu0
          %v570 = vadd.f32 %v393, %v569
          %571 = vmatprep.mubr.bf16.mxu0 0
          %572 = vmatmul.mubr.bf16.gmra.mrb[0].mxu0 %v352
          %v573 = vpop.f32.mrb[0].mxu0
          %v574 = vadd.f32 %v389, %v573
          %v575 = vpop.f32.mrb[0].mxu0
          %v576 = vadd.f32 %v393, %v575
          %v577 = vpop.f32.mrb[0].mxu0
          %v578 = vadd.f32 %v389, %v577
          %v579 = vpop.f32.mrb[0].mxu0
          %v580 = vadd.f32 %v393, %v579
          %581 = vdwg.mxu0
          %582 = vmatprep.subr.bf16.mxu0 0
          %583 = vmatpush1.bf16.msra.mxu0 %v483
          %584 = vmatprep.subr.bf16.mxu0 0
          %585 = vmatpush1.bf16.msra.mxu0 %v486
          %586 = vmatprep.subr.bf16.mxu0 0
          %587 = vmatpush1.bf16.msra.mxu0 %v489
          %588 = vmatprep.subr.bf16.mxu0 0
          %589 = vmatpush1.bf16.msra.mxu0 %v492
          %590 = vmatprep.subr.bf16.mxu0 0
          %591 = vmatpush1.bf16.msra.mxu0 %v495
          %592 = vmatprep.subr.bf16.mxu0 0
          %593 = vmatpush1.bf16.msra.mxu0 %v498
          %594 = vmatprep.subr.bf16.mxu0 0
          %595 = vmatpush1.bf16.msra.mxu0 %v501
          %596 = vmatprep.subr.bf16.mxu0 0
          %597 = vmatpush1.bf16.msra.mxu0 %v504
          %598 = vmatprep.subr.bf16.mxu0 0
          %599 = vmatpush1.bf16.msra.mxu0 0
          %600 = vmatprep.subr.bf16.mxu0 0
          %601 = vmatpush1.bf16.msra.mxu0 0
          %602 = vmatprep.subr.bf16.mxu0 0
          %603 = vmatpush1.bf16.msra.mxu0 0
          %604 = vmatprep.subr.bf16.mxu0 0
          %605 = vmatpush1.bf16.msra.mxu0 0
          %606 = vmatprep.subr.bf16.mxu0 0
          %607 = vmatpush1.bf16.msra.mxu0 0
          %608 = vmatprep.subr.bf16.mxu0 0
          %609 = vmatpush1.bf16.msra.mxu0 0
          %610 = vmatprep.subr.bf16.mxu0 0
          %611 = vmatpush1.bf16.msra.mxu0 0
          %612 = vmatprep.subr.bf16.mxu0 0
          %613 = vmatpush1.bf16.msra.mxu0 0
          %614 = vmatprep.mubr.bf16.mxu0 0
          %615 = vmatmul.mubr.bf16.gmra.mrb[0].mxu0 %v351
          %v616 = vpop.f32.mrb[0].mxu0
          %v617 = vadd.f32 %v397, %v616
          %v618 = vpop.f32.mrb[0].mxu0
          %v619 = vpop.f32.mrb[0].mxu0
          %v620 = vadd.f32 %v397, %v619
          %v621 = vpop.f32.mrb[0].mxu0
          %622 = vmatprep.mubr.bf16.mxu0 0
          %623 = vmatmul.mubr.bf16.gmra.mrb[0].mxu0 %v352
          %v624 = vpop.f32.mrb[0].mxu0
          %v625 = vadd.f32 %v397, %v624
          %v626 = vpop.f32.mrb[0].mxu0
          %v627 = vpop.f32.mrb[0].mxu0
          %v628 = vadd.f32 %v397, %v627
          %v629 = vpop.f32.mrb[0].mxu0
          %630 = vdwg.mxu0
          %v631 = vpack.c.bf16 %v568, %v564
          %v632 = vpack.c.bf16 %v578, %v574
          %vm633 = vcmask 261120
          %634 = vst.msk [vmem:[#allocation2] sm:$0xff] %vm633, %v631
          %635 = vst.msk [vmem:[#allocation2 + $0x8] sm:$0xff] %vm633, %v632
          %v636 = vpack.c.bf16 %v570, %v566
          %v637 = vpack.c.bf16 %v580, %v576
          %638 = vst.msk [vmem:[#allocation3] sm:$0xff] %vm633, %v636
          %639 = vst.msk [vmem:[#allocation3 + $0x8] sm:$0xff] %vm633, %v637
          %v640 = vpack.c.bf16 %v620, %v617
          %v641 = vpack.c.bf16 %v628, %v625
          %642 = vst.msk [vmem:[#allocation4] sm:$0xff] %vm633, %v640
          %643 = vst.msk [vmem:[#allocation4 + $0x8] sm:$0xff] %vm633, %v641
          %646 = vrot.lane.b32.xlu0 %v631, 96
          %v647 = vpop.permute.xlu0 %646
          %648 = vrot.lane.b32.xlu0 %v632, 96
          %v649 = vpop.permute.xlu0 %648
          %s652 = scalar_lea.vmem [#allocation2], 16
          %653 = vst.msk [vmem:[%s652] sm:$0xff] %vm633, %v647
          %654 = vst.msk [vmem:[%s652 + $0x8] sm:$0xff] %vm633, %v649
          %657 = vrot.lane.b32.xlu0 %v636, 96
          %v658 = vpop.permute.xlu0 %657
          %659 = vrot.lane.b32.xlu0 %v637, 96
          %v660 = vpop.permute.xlu0 %659
          %s663 = scalar_lea.vmem [#allocation3], 16
          %664 = vst.msk [vmem:[%s663] sm:$0xff] %vm633, %v658
          %665 = vst.msk [vmem:[%s663 + $0x8] sm:$0xff] %vm633, %v660
          %668 = vrot.lane.b32.xlu0 %v640, 96
          %v669 = vpop.permute.xlu0 %668
          %670 = vrot.lane.b32.xlu0 %v641, 96
          %v671 = vpop.permute.xlu0 %670
          %s674 = scalar_lea.vmem [#allocation4], 16
          %675 = vst.msk [vmem:[%s674] sm:$0xff] %vm633, %v669
          %676 = vst.msk [vmem:[%s674 + $0x8] sm:$0xff] %vm633, %v671
          %677 = vrot.lane.b32.xlu0 %v631, 64
          %v678 = vpop.permute.xlu0 %677
          %679 = vrot.lane.b32.xlu0 %v632, 64
          %v680 = vpop.permute.xlu0 %679
          %s683 = scalar_lea.vmem [#allocation2], 32
          %684 = vst.msk [vmem:[%s683] sm:$0xff] %vm633, %v678
          %685 = vst.msk [vmem:[%s683 + $0x8] sm:$0xff] %vm633, %v680
          %686 = vrot.lane.b32.xlu0 %v636, 64
          %v687 = vpop.permute.xlu0 %686
          %688 = vrot.lane.b32.xlu0 %v637, 64
          %v689 = vpop.permute.xlu0 %688
          %s692 = scalar_lea.vmem [#allocation3], 32
          %693 = vst.msk [vmem:[%s692] sm:$0xff] %vm633, %v687
          %694 = vst.msk [vmem:[%s692 + $0x8] sm:$0xff] %vm633, %v689
          %695 = vrot.lane.b32.xlu0 %v640, 64
          %v696 = vpop.permute.xlu0 %695
          %697 = vrot.lane.b32.xlu0 %v641, 64
          %v698 = vpop.permute.xlu0 %697
          %s701 = scalar_lea.vmem [#allocation4], 32
          %702 = vst.msk [vmem:[%s701] sm:$0xff] %vm633, %v696
          %703 = vst.msk [vmem:[%s701 + $0x8] sm:$0xff] %vm633, %v698
          %704 = vrot.lane.b32.xlu0 %v631, 32
          %v705 = vpop.permute.xlu0 %704
          %706 = vrot.lane.b32.xlu0 %v632, 32
          %v707 = vpop.permute.xlu0 %706
          %s710 = scalar_lea.vmem [#allocation2], 48
          %711 = vst.msk [vmem:[%s710] sm:$0xff] %vm633, %v705
          %712 = vst.msk [vmem:[%s710 + $0x8] sm:$0xff] %vm633, %v707
          %713 = vrot.lane.b32.xlu0 %v636, 32
          %v714 = vpop.permute.xlu0 %713
          %715 = vrot.lane.b32.xlu0 %v637, 32
          %v716 = vpop.permute.xlu0 %715
          %s719 = scalar_lea.vmem [#allocation3], 48
          %720 = vst.msk [vmem:[%s719] sm:$0xff] %vm633, %v714
          %721 = vst.msk [vmem:[%s719 + $0x8] sm:$0xff] %vm633, %v716
          %722 = vrot.lane.b32.xlu0 %v640, 32
          %v723 = vpop.permute.xlu0 %722
          %724 = vrot.lane.b32.xlu0 %v641, 32
          %v725 = vpop.permute.xlu0 %724
          %s728 = scalar_lea.vmem [#allocation4], 48
          %729 = vst.msk [vmem:[%s728] sm:$0xff] %vm633, %v723
          %730 = vst.msk [vmem:[%s728 + $0x8] sm:$0xff] %vm633, %v725
        $region64: #{tpu_custom_call.1} parent=47 // pred_fallthru
          _
        %s731 = smul.u32 %s30, 16
        %s732 = sshra.s32 %s731, 4
        %s733 = sand.u32 %s731, 15
        %s734 = smul.addr %s732, 8
        %s735 = scalar_lea.vmem [#allocation2], %s734
        %v736 = vld [vmem:[%s735] sm:$0xff]
        %v737 = vld [vmem:[%s735 + $0x10] sm:$0xff]
        %v738 = vld [vmem:[%s735 + $0x20] sm:$0xff]
        %v739 = vld [vmem:[%s735 + $0x30] sm:$0xff]
        %v740 = vld [vmem:[#allocation3] sm:$0xff]
        %v741 = vld [vmem:[#allocation3 + $0x8] sm:$0xff]
        %v742 = vld [vmem:[#allocation3 + $0x10] sm:$0xff]
        %v743 = vld [vmem:[#allocation3 + $0x18] sm:$0xff]
        %v744 = vld [vmem:[#allocation3 + $0x20] sm:$0xff]
        %v745 = vld [vmem:[#allocation3 + $0x28] sm:$0xff]
        %v746 = vld [vmem:[#allocation3 + $0x30] sm:$0xff]
        %v747 = vld [vmem:[#allocation3 + $0x38] sm:$0xff]
        %v748 = vld [vmem:[#allocation4] sm:$0xff]
        %v749 = vld [vmem:[#allocation4 + $0x8] sm:$0xff]
        %v750 = vld [vmem:[#allocation4 + $0x10] sm:$0xff]
        %v751 = vld [vmem:[#allocation4 + $0x18] sm:$0xff]
        %v752 = vld [vmem:[#allocation4 + $0x20] sm:$0xff]
        %v753 = vld [vmem:[#allocation4 + $0x28] sm:$0xff]
        %v754 = vld [vmem:[#allocation4 + $0x30] sm:$0xff]
        %v755 = vld [vmem:[#allocation4 + $0x38] sm:$0xff]
        %vm756 = vcmask 261120
        %v758 = vsel %vm756, %v736, 0
        %v761 = vsel %vm756, %v740, 0
        %v764 = vsel %vm756, %v741, 0
        %766 = vmatprep.subr.bf16.mxu0 0
        %767 = vmatpush1.bf16.xpose.msra.mxu0 %v761
        %768 = vmatprep.subr.bf16.mxu0 0
        %769 = vmatpush1.bf16.xpose.msra.mxu0 %v764
        %770 = vmatprep.subr.bf16.mxu0 0
        %771 = vmatpush1.bf16.xpose.msra.mxu0 0
        %772 = vmatprep.subr.bf16.mxu0 0
        %773 = vmatpush1.bf16.xpose.msra.mxu0 0
        %774 = vmatprep.subr.bf16.mxu0 0
        %775 = vmatpush1.bf16.xpose.msra.mxu0 0
        %776 = vmatprep.subr.bf16.mxu0 0
        %777 = vmatpush1.bf16.xpose.msra.mxu0 0
        %778 = vmatprep.subr.bf16.mxu0 0
        %779 = vmatpush1.bf16.xpose.msra.mxu0 0
        %780 = vmatprep.subr.bf16.mxu0 0
        %781 = vmatpush1.bf16.xpose.msra.mxu0 0
        %782 = vmatprep.subr.bf16.mxu0 0
        %783 = vmatpush1.bf16.xpose.msra.mxu0 0
        %784 = vmatprep.subr.bf16.mxu0 0
        %785 = vmatpush1.bf16.xpose.msra.mxu0 0
        %786 = vmatprep.subr.bf16.mxu0 0
        %787 = vmatpush1.bf16.xpose.msra.mxu0 0
        %788 = vmatprep.subr.bf16.mxu0 0
        %789 = vmatpush1.bf16.xpose.msra.mxu0 0
        %790 = vmatprep.subr.bf16.mxu0 0
        %791 = vmatpush1.bf16.xpose.msra.mxu0 0
        %792 = vmatprep.subr.bf16.mxu0 0
        %793 = vmatpush1.bf16.xpose.msra.mxu0 0
        %794 = vmatprep.subr.bf16.mxu0 0
        %795 = vmatpush1.bf16.xpose.msra.mxu0 0
        %796 = vmatprep.subr.bf16.mxu0 0
        %797 = vmatpush1.bf16.xpose.msra.mxu0 0
        %798 = vmatprep.mubr.bf16.mxu0 0
        %799 = vmatmul.mubr.bf16.gmra.mrb[0].mxu0 %v758
        %v800 = vpop.f32.mrb[0].mxu0
        %v801 = vadd.f32 0.0, %v800
        %v802 = vpop.f32.mrb[0].mxu0
        %v803 = vpop.f32.mrb[0].mxu0
        %v804 = vadd.f32 0.0, %v803
        %v805 = vpop.f32.mrb[0].mxu0
        %806 = vdwg.mxu0
        %v808 = vsel %vm756, %v737, 0
        %v811 = vsel %vm756, %v742, 0
        %v814 = vsel %vm756, %v743, 0
        %816 = vmatprep.subr.bf16.mxu0 0
        %817 = vmatpush1.bf16.xpose.msra.mxu0 %v811
        %818 = vmatprep.subr.bf16.mxu0 0
        %819 = vmatpush1.bf16.xpose.msra.mxu0 %v814
        %820 = vmatprep.subr.bf16.mxu0 0
        %821 = vmatpush1.bf16.xpose.msra.mxu0 0
        %822 = vmatprep.subr.bf16.mxu0 0
        %823 = vmatpush1.bf16.xpose.msra.mxu0 0
        %824 = vmatprep.subr.bf16.mxu0 0
        %825 = vmatpush1.bf16.xpose.msra.mxu0 0
        %826 = vmatprep.subr.bf16.mxu0 0
        %827 = vmatpush1.bf16.xpose.msra.mxu0 0
        %828 = vmatprep.subr.bf16.mxu0 0
        %829 = vmatpush1.bf16.xpose.msra.mxu0 0
        %830 = vmatprep.subr.bf16.mxu0 0
        %831 = vmatpush1.bf16.xpose.msra.mxu0 0
        %832 = vmatprep.subr.bf16.mxu0 0
        %833 = vmatpush1.bf16.xpose.msra.mxu0 0
        %834 = vmatprep.subr.bf16.mxu0 0
        %835 = vmatpush1.bf16.xpose.msra.mxu0 0
        %836 = vmatprep.subr.bf16.mxu0 0
        %837 = vmatpush1.bf16.xpose.msra.mxu0 0
        %838 = vmatprep.subr.bf16.mxu0 0
        %839 = vmatpush1.bf16.xpose.msra.mxu0 0
        %840 = vmatprep.subr.bf16.mxu0 0
        %841 = vmatpush1.bf16.xpose.msra.mxu0 0
        %842 = vmatprep.subr.bf16.mxu0 0
        %843 = vmatpush1.bf16.xpose.msra.mxu0 0
        %844 = vmatprep.subr.bf16.mxu0 0
        %845 = vmatpush1.bf16.xpose.msra.mxu0 0
        %846 = vmatprep.subr.bf16.mxu0 0
        %847 = vmatpush1.bf16.xpose.msra.mxu0 0
        %848 = vmatprep.mubr.bf16.mxu0 0
        %849 = vmatmul.mubr.bf16.gmra.mrb[0].mxu0 %v808
        %v850 = vpop.f32.mrb[0].mxu0
        %v851 = vadd.f32 0.0, %v850
        %v852 = vpop.f32.mrb[0].mxu0
        %v853 = vpop.f32.mrb[0].mxu0
        %v854 = vadd.f32 0.0, %v853
        %v855 = vpop.f32.mrb[0].mxu0
        %856 = vdwg.mxu0
        %v858 = vsel %vm756, %v738, 0
        %v861 = vsel %vm756, %v744, 0
        %v864 = vsel %vm756, %v745, 0
        %866 = vmatprep.subr.bf16.mxu0 0
        %867 = vmatpush1.bf16.xpose.msra.mxu0 %v861
        %868 = vmatprep.subr.bf16.mxu0 0
        %869 = vmatpush1.bf16.xpose.msra.mxu0 %v864
        %870 = vmatprep.subr.bf16.mxu0 0
        %871 = vmatpush1.bf16.xpose.msra.mxu0 0
        %872 = vmatprep.subr.bf16.mxu0 0
        %873 = vmatpush1.bf16.xpose.msra.mxu0 0
        %874 = vmatprep.subr.bf16.mxu0 0
        %875 = vmatpush1.bf16.xpose.msra.mxu0 0
        %876 = vmatprep.subr.bf16.mxu0 0
        %877 = vmatpush1.bf16.xpose.msra.mxu0 0
        %878 = vmatprep.subr.bf16.mxu0 0
        %879 = vmatpush1.bf16.xpose.msra.mxu0 0
        %880 = vmatprep.subr.bf16.mxu0 0
        %881 = vmatpush1.bf16.xpose.msra.mxu0 0
        %882 = vmatprep.subr.bf16.mxu0 0
        %883 = vmatpush1.bf16.xpose.msra.mxu0 0
        %884 = vmatprep.subr.bf16.mxu0 0
        %885 = vmatpush1.bf16.xpose.msra.mxu0 0
        %886 = vmatprep.subr.bf16.mxu0 0
        %887 = vmatpush1.bf16.xpose.msra.mxu0 0
        %888 = vmatprep.subr.bf16.mxu0 0
        %889 = vmatpush1.bf16.xpose.msra.mxu0 0
        %890 = vmatprep.subr.bf16.mxu0 0
        %891 = vmatpush1.bf16.xpose.msra.mxu0 0
        %892 = vmatprep.subr.bf16.mxu0 0
        %893 = vmatpush1.bf16.xpose.msra.mxu0 0
        %894 = vmatprep.subr.bf16.mxu0 0
        %895 = vmatpush1.bf16.xpose.msra.mxu0 0
        %896 = vmatprep.subr.bf16.mxu0 0
        %897 = vmatpush1.bf16.xpose.msra.mxu0 0
        %898 = vmatprep.mubr.bf16.mxu0 0
        %899 = vmatmul.mubr.bf16.gmra.mrb[0].mxu0 %v858
        %v900 = vpop.f32.mrb[0].mxu0
        %v901 = vadd.f32 0.0, %v900
        %v902 = vpop.f32.mrb[0].mxu0
        %v903 = vpop.f32.mrb[0].mxu0
        %v904 = vadd.f32 0.0, %v903
        %v905 = vpop.f32.mrb[0].mxu0
        %906 = vdwg.mxu0
        %v908 = vsel %vm756, %v739, 0
        %v911 = vsel %vm756, %v746, 0
        %v914 = vsel %vm756, %v747, 0
        %916 = vmatprep.subr.bf16.mxu0 0
        %917 = vmatpush1.bf16.xpose.msra.mxu0 %v911
        %918 = vmatprep.subr.bf16.mxu0 0
        %919 = vmatpush1.bf16.xpose.msra.mxu0 %v914
        %920 = vmatprep.subr.bf16.mxu0 0
        %921 = vmatpush1.bf16.xpose.msra.mxu0 0
        %922 = vmatprep.subr.bf16.mxu0 0
        %923 = vmatpush1.bf16.xpose.msra.mxu0 0
        %924 = vmatprep.subr.bf16.mxu0 0
        %925 = vmatpush1.bf16.xpose.msra.mxu0 0
        %926 = vmatprep.subr.bf16.mxu0 0
        %927 = vmatpush1.bf16.xpose.msra.mxu0 0
        %928 = vmatprep.subr.bf16.mxu0 0
        %929 = vmatpush1.bf16.xpose.msra.mxu0 0
        %930 = vmatprep.subr.bf16.mxu0 0
        %931 = vmatpush1.bf16.xpose.msra.mxu0 0
        %932 = vmatprep.subr.bf16.mxu0 0
        %933 = vmatpush1.bf16.xpose.msra.mxu0 0
        %934 = vmatprep.subr.bf16.mxu0 0
        %935 = vmatpush1.bf16.xpose.msra.mxu0 0
        %936 = vmatprep.subr.bf16.mxu0 0
        %937 = vmatpush1.bf16.xpose.msra.mxu0 0
        %938 = vmatprep.subr.bf16.mxu0 0
        %939 = vmatpush1.bf16.xpose.msra.mxu0 0
        %940 = vmatprep.subr.bf16.mxu0 0
        %941 = vmatpush1.bf16.xpose.msra.mxu0 0
        %942 = vmatprep.subr.bf16.mxu0 0
        %943 = vmatpush1.bf16.xpose.msra.mxu0 0
        %944 = vmatprep.subr.bf16.mxu0 0
        %945 = vmatpush1.bf16.xpose.msra.mxu0 0
        %946 = vmatprep.subr.bf16.mxu0 0
        %947 = vmatpush1.bf16.xpose.msra.mxu0 0
        %948 = vmatprep.mubr.bf16.mxu0 0
        %949 = vmatmul.mubr.bf16.gmra.mrb[0].mxu0 %v908
        %v950 = vpop.f32.mrb[0].mxu0
        %v951 = vadd.f32 0.0, %v950
        %v952 = vpop.f32.mrb[0].mxu0
        %v953 = vpop.f32.mrb[0].mxu0
        %v954 = vadd.f32 0.0, %v953
        %v955 = vpop.f32.mrb[0].mxu0
        %956 = vdwg.mxu0
        %v957 = vsel %vm756, %v801, -inf
        %958 = vmax.xlane.f32.xlu0 %v957
        %v959 = vpop.xlane.xlu0 %958
        %v960 = vsel %vm756, %v804, -inf
        %961 = vmax.xlane.f32.xlu0 %v960
        %v962 = vpop.xlane.xlu0 %961
        %v963 = vsel %vm756, %v851, -inf
        %964 = vmax.xlane.f32.xlu0 %v963
        %v965 = vpop.xlane.xlu0 %964
        %v966 = vsel %vm756, %v854, -inf
        %967 = vmax.xlane.f32.xlu0 %v966
        %v968 = vpop.xlane.xlu0 %967
        %v969 = vsel %vm756, %v901, -inf
        %970 = vmax.xlane.f32.xlu0 %v969
        %v971 = vpop.xlane.xlu0 %970
        %v972 = vsel %vm756, %v904, -inf
        %973 = vmax.xlane.f32.xlu0 %v972
        %v974 = vpop.xlane.xlu0 %973
        %v975 = vsel %vm756, %v951, -inf
        %976 = vmax.xlane.f32.xlu0 %v975
        %v977 = vpop.xlane.xlu0 %976
        %v978 = vsel %vm756, %v954, -inf
        %979 = vmax.xlane.f32.xlu0 %v978
        %v980 = vpop.xlane.xlu0 %979
        %v981 = vsub.f32 %v801, %v959
        %v982 = vsub.f32 %v804, %v962
        %v983 = vsub.f32 %v851, %v965
        %v984 = vsub.f32 %v854, %v968
        %v985 = vsub.f32 %v901, %v971
        %v986 = vsub.f32 %v904, %v974
        %v987 = vsub.f32 %v951, %v977
        %v988 = vsub.f32 %v954, %v980
        %v989 = vmul.f32 %v981, 1.442695
        %v990 = vpow.pop %v989
        %v991 = vmul.f32 %v982, 1.442695
        %v992 = vpow.pop %v991
        %v993 = vmul.f32 %v983, 1.442695
        %v994 = vpow.pop %v993
        %v995 = vmul.f32 %v984, 1.442695
        %v996 = vpow.pop %v995
        %v997 = vmul.f32 %v985, 1.442695
        %v998 = vpow.pop %v997
        %v999 = vmul.f32 %v986, 1.442695
        %v1000 = vpow.pop %v999
        %v1001 = vmul.f32 %v987, 1.442695
        %v1002 = vpow.pop %v1001
        %v1003 = vmul.f32 %v988, 1.442695
        %v1004 = vpow.pop %v1003
        %v1005 = vsel %vm756, %v990, 0.0
        %1006 = vadd.xlane.f32.xlu0 %v1005
        %v1007 = vpop.xlane.xlu0 %1006
        %v1008 = vsel %vm756, %v992, 0.0
        %1009 = vadd.xlane.f32.xlu0 %v1008
        %v1010 = vpop.xlane.xlu0 %1009
        %v1011 = vsel %vm756, %v994, 0.0
        %1012 = vadd.xlane.f32.xlu0 %v1011
        %v1013 = vpop.xlane.xlu0 %1012
        %v1014 = vsel %vm756, %v996, 0.0
        %1015 = vadd.xlane.f32.xlu0 %v1014
        %v1016 = vpop.xlane.xlu0 %1015
        %v1017 = vsel %vm756, %v998, 0.0
        %1018 = vadd.xlane.f32.xlu0 %v1017
        %v1019 = vpop.xlane.xlu0 %1018
        %v1020 = vsel %vm756, %v1000, 0.0
        %1021 = vadd.xlane.f32.xlu0 %v1020
        %v1022 = vpop.xlane.xlu0 %1021
        %v1023 = vsel %vm756, %v1002, 0.0
        %1024 = vadd.xlane.f32.xlu0 %v1023
        %v1025 = vpop.xlane.xlu0 %1024
        %v1026 = vsel %vm756, %v1004, 0.0
        %1027 = vadd.xlane.f32.xlu0 %v1026
        %v1028 = vpop.xlane.xlu0 %1027
        %v1029 = vpack.c.bf16 %v992, %v990
        %v1030 = vpack.c.bf16 %v996, %v994
        %v1031 = vpack.c.bf16 %v1000, %v998
        %v1032 = vpack.c.bf16 %v1004, %v1002
        %v1034 = vsel %vm756, %v1029, 0
        %1036 = vmatprep.subr.bf16.mxu0 0
        %1037 = vmatpush1.bf16.msra.mxu0 %v748
        %1038 = vmatprep.subr.bf16.mxu0 0
        %1039 = vmatpush1.bf16.msra.mxu0 %v749
        %1040 = vmatprep.subr.bf16.mxu0 0
        %1041 = vmatpush1.bf16.msra.mxu0 0
        %1042 = vmatprep.subr.bf16.mxu0 0
        %1043 = vmatpush1.bf16.msra.mxu0 0
        %1044 = vmatprep.subr.bf16.mxu0 0
        %1045 = vmatpush1.bf16.msra.mxu0 0
        %1046 = vmatprep.subr.bf16.mxu0 0
        %1047 = vmatpush1.bf16.msra.mxu0 0
        %1048 = vmatprep.subr.bf16.mxu0 0
        %1049 = vmatpush1.bf16.msra.mxu0 0
        %1050 = vmatprep.subr.bf16.mxu0 0
        %1051 = vmatpush1.bf16.msra.mxu0 0
        %1052 = vmatprep.subr.bf16.mxu0 0
        %1053 = vmatpush1.bf16.msra.mxu0 0
        %1054 = vmatprep.subr.bf16.mxu0 0
        %1055 = vmatpush1.bf16.msra.mxu0 0
        %1056 = vmatprep.subr.bf16.mxu0 0
        %1057 = vmatpush1.bf16.msra.mxu0 0
        %1058 = vmatprep.subr.bf16.mxu0 0
        %1059 = vmatpush1.bf16.msra.mxu0 0
        %1060 = vmatprep.subr.bf16.mxu0 0
        %1061 = vmatpush1.bf16.msra.mxu0 0
        %1062 = vmatprep.subr.bf16.mxu0 0
        %1063 = vmatpush1.bf16.msra.mxu0 0
        %1064 = vmatprep.subr.bf16.mxu0 0
        %1065 = vmatpush1.bf16.msra.mxu0 0
        %1066 = vmatprep.subr.bf16.mxu0 0
        %1067 = vmatpush1.bf16.msra.mxu0 0
        %1068 = vmatprep.mubr.bf16.mxu0 0
        %1069 = vmatmul.mubr.bf16.gmra.mrb[0].mxu0 %v1034
        %v1070 = vpop.f32.mrb[0].mxu0
        %v1071 = vadd.f32 0.0, %v1070
        %v1072 = vpop.f32.mrb[0].mxu0
        %v1073 = vpop.f32.mrb[0].mxu0
        %v1074 = vadd.f32 0.0, %v1073
        %v1075 = vpop.f32.mrb[0].mxu0
        %1076 = vdwg.mxu0
        %v1078 = vsel %vm756, %v1030, 0
        %1080 = vmatprep.subr.bf16.mxu0 0
        %1081 = vmatpush1.bf16.msra.mxu0 %v750
        %1082 = vmatprep.subr.bf16.mxu0 0
        %1083 = vmatpush1.bf16.msra.mxu0 %v751
        %1084 = vmatprep.subr.bf16.mxu0 0
        %1085 = vmatpush1.bf16.msra.mxu0 0
        %1086 = vmatprep.subr.bf16.mxu0 0
        %1087 = vmatpush1.bf16.msra.mxu0 0
        %1088 = vmatprep.subr.bf16.mxu0 0
        %1089 = vmatpush1.bf16.msra.mxu0 0
        %1090 = vmatprep.subr.bf16.mxu0 0
        %1091 = vmatpush1.bf16.msra.mxu0 0
        %1092 = vmatprep.subr.bf16.mxu0 0
        %1093 = vmatpush1.bf16.msra.mxu0 0
        %1094 = vmatprep.subr.bf16.mxu0 0
        %1095 = vmatpush1.bf16.msra.mxu0 0
        %1096 = vmatprep.subr.bf16.mxu0 0
        %1097 = vmatpush1.bf16.msra.mxu0 0
        %1098 = vmatprep.subr.bf16.mxu0 0
        %1099 = vmatpush1.bf16.msra.mxu0 0
        %1100 = vmatprep.subr.bf16.mxu0 0
        %1101 = vmatpush1.bf16.msra.mxu0 0
        %1102 = vmatprep.subr.bf16.mxu0 0
        %1103 = vmatpush1.bf16.msra.mxu0 0
        %1104 = vmatprep.subr.bf16.mxu0 0
        %1105 = vmatpush1.bf16.msra.mxu0 0
        %1106 = vmatprep.subr.bf16.mxu0 0
        %1107 = vmatpush1.bf16.msra.mxu0 0
        %1108 = vmatprep.subr.bf16.mxu0 0
        %1109 = vmatpush1.bf16.msra.mxu0 0
        %1110 = vmatprep.subr.bf16.mxu0 0
        %1111 = vmatpush1.bf16.msra.mxu0 0
        %1112 = vmatprep.mubr.bf16.mxu0 0
        %1113 = vmatmul.mubr.bf16.gmra.mrb[0].mxu0 %v1078
        %v1114 = vpop.f32.mrb[0].mxu0
        %v1115 = vadd.f32 0.0, %v1114
        %v1116 = vpop.f32.mrb[0].mxu0
        %v1117 = vpop.f32.mrb[0].mxu0
        %v1118 = vadd.f32 0.0, %v1117
        %v1119 = vpop.f32.mrb[0].mxu0
        %1120 = vdwg.mxu0
        %v1122 = vsel %vm756, %v1031, 0
        %1124 = vmatprep.subr.bf16.mxu0 0
        %1125 = vmatpush1.bf16.msra.mxu0 %v752
        %1126 = vmatprep.subr.bf16.mxu0 0
        %1127 = vmatpush1.bf16.msra.mxu0 %v753
        %1128 = vmatprep.subr.bf16.mxu0 0
        %1129 = vmatpush1.bf16.msra.mxu0 0
        %1130 = vmatprep.subr.bf16.mxu0 0
        %1131 = vmatpush1.bf16.msra.mxu0 0
        %1132 = vmatprep.subr.bf16.mxu0 0
        %1133 = vmatpush1.bf16.msra.mxu0 0
        %1134 = vmatprep.subr.bf16.mxu0 0
        %1135 = vmatpush1.bf16.msra.mxu0 0
        %1136 = vmatprep.subr.bf16.mxu0 0
        %1137 = vmatpush1.bf16.msra.mxu0 0
        %1138 = vmatprep.subr.bf16.mxu0 0
        %1139 = vmatpush1.bf16.msra.mxu0 0
        %1140 = vmatprep.subr.bf16.mxu0 0
        %1141 = vmatpush1.bf16.msra.mxu0 0
        %1142 = vmatprep.subr.bf16.mxu0 0
        %1143 = vmatpush1.bf16.msra.mxu0 0
        %1144 = vmatprep.subr.bf16.mxu0 0
        %1145 = vmatpush1.bf16.msra.mxu0 0
        %1146 = vmatprep.subr.bf16.mxu0 0
        %1147 = vmatpush1.bf16.msra.mxu0 0
        %1148 = vmatprep.subr.bf16.mxu0 0
        %1149 = vmatpush1.bf16.msra.mxu0 0
        %1150 = vmatprep.subr.bf16.mxu0 0
        %1151 = vmatpush1.bf16.msra.mxu0 0
        %1152 = vmatprep.subr.bf16.mxu0 0
        %1153 = vmatpush1.bf16.msra.mxu0 0
        %1154 = vmatprep.subr.bf16.mxu0 0
        %1155 = vmatpush1.bf16.msra.mxu0 0
        %1156 = vmatprep.mubr.bf16.mxu0 0
        %1157 = vmatmul.mubr.bf16.gmra.mrb[0].mxu0 %v1122
        %v1158 = vpop.f32.mrb[0].mxu0
        %v1159 = vadd.f32 0.0, %v1158
        %v1160 = vpop.f32.mrb[0].mxu0
        %v1161 = vpop.f32.mrb[0].mxu0
        %v1162 = vadd.f32 0.0, %v1161
        %v1163 = vpop.f32.mrb[0].mxu0
        %1164 = vdwg.mxu0
        %v1166 = vsel %vm756, %v1032, 0
        %1168 = vmatprep.subr.bf16.mxu0 0
        %1169 = vmatpush1.bf16.msra.mxu0 %v754
        %1170 = vmatprep.subr.bf16.mxu0 0
        %1171 = vmatpush1.bf16.msra.mxu0 %v755
        %1172 = vmatprep.subr.bf16.mxu0 0
        %1173 = vmatpush1.bf16.msra.mxu0 0
        %1174 = vmatprep.subr.bf16.mxu0 0
        %1175 = vmatpush1.bf16.msra.mxu0 0
        %1176 = vmatprep.subr.bf16.mxu0 0
        %1177 = vmatpush1.bf16.msra.mxu0 0
        %1178 = vmatprep.subr.bf16.mxu0 0
        %1179 = vmatpush1.bf16.msra.mxu0 0
        %1180 = vmatprep.subr.bf16.mxu0 0
        %1181 = vmatpush1.bf16.msra.mxu0 0
        %1182 = vmatprep.subr.bf16.mxu0 0
        %1183 = vmatpush1.bf16.msra.mxu0 0
        %1184 = vmatprep.subr.bf16.mxu0 0
        %1185 = vmatpush1.bf16.msra.mxu0 0
        %1186 = vmatprep.subr.bf16.mxu0 0
        %1187 = vmatpush1.bf16.msra.mxu0 0
        %1188 = vmatprep.subr.bf16.mxu0 0
        %1189 = vmatpush1.bf16.msra.mxu0 0
        %1190 = vmatprep.subr.bf16.mxu0 0
        %1191 = vmatpush1.bf16.msra.mxu0 0
        %1192 = vmatprep.subr.bf16.mxu0 0
        %1193 = vmatpush1.bf16.msra.mxu0 0
        %1194 = vmatprep.subr.bf16.mxu0 0
        %1195 = vmatpush1.bf16.msra.mxu0 0
        %1196 = vmatprep.subr.bf16.mxu0 0
        %1197 = vmatpush1.bf16.msra.mxu0 0
        %1198 = vmatprep.subr.bf16.mxu0 0
        %1199 = vmatpush1.bf16.msra.mxu0 0
        %1200 = vmatprep.mubr.bf16.mxu0 0
        %1201 = vmatmul.mubr.bf16.gmra.mrb[0].mxu0 %v1166
        %v1202 = vpop.f32.mrb[0].mxu0
        %v1203 = vadd.f32 0.0, %v1202
        %v1204 = vpop.f32.mrb[0].mxu0
        %v1205 = vpop.f32.mrb[0].mxu0
        %v1206 = vadd.f32 0.0, %v1205
        %v1207 = vpop.f32.mrb[0].mxu0
        %1208 = vdwg.mxu0
        %v1209 = vrcp.pop %v1007
        %v1210 = vrcp.pop %v1010
        %v1211 = vrcp.pop %v1013
        %v1212 = vrcp.pop %v1016
        %v1213 = vrcp.pop %v1019
        %v1214 = vrcp.pop %v1022
        %v1215 = vrcp.pop %v1025
        %v1216 = vrcp.pop %v1028
        %v1217 = vmul.f32 %v1071, %v1209
        %v1218 = vmul.f32 %v1074, %v1210
        %v1219 = vmul.f32 %v1115, %v1211
        %v1220 = vmul.f32 %v1118, %v1212
        %v1221 = vmul.f32 %v1159, %v1213
        %v1222 = vmul.f32 %v1162, %v1214
        %v1223 = vmul.f32 %v1203, %v1215
        %v1224 = vmul.f32 %v1206, %v1216
        %v1225 = vpack.c.bf16 %v1218, %v1217
        %v1226 = vpack.c.bf16 %v1220, %v1219
        %v1227 = vpack.c.bf16 %v1222, %v1221
        %v1228 = vpack.c.bf16 %v1224, %v1223
        %1229 = vst.msk [vmem:[#allocation5] sm:$0xff] %vm756, %v1225
        %1231 = vrot.lane.b32.xlu0 %v1226, 32
        %v1232 = vpop.permute.xlu0 %1231
        %vm1234 = vcmask 523520
        %1235 = vst.msk [vmem:[#allocation5] sm:$0xff] %vm1234, %v1232
        %1237 = vrot.lane.b32.xlu0 %v1227, 64
        %v1238 = vpop.permute.xlu0 %1237
        %vm1240 = vcmask 785920
        %1241 = vst.msk [vmem:[#allocation5] sm:$0xff] %vm1240, %v1238
        %1243 = vrot.lane.b32.xlu0 %v1228, 96
        %v1244 = vpop.permute.xlu0 %1243
        %vm1246 = vcmask 1048320
        %1247 = vst.msk [vmem:[#allocation5] sm:$0xff] %vm1246, %v1244
        %v1248 = vld [vmem:[#allocation5] sm:$0xff]
        %v1249 = vld [vmem:[#allocation11] sm:$0xf]
        %v1250 = vld [vmem:[#allocation11 + $0x4] sm:$0xf]
        %v1251 = vld [vmem:[#allocation11 + $0x8] sm:$0xf]
        %v1252 = vld [vmem:[#allocation11 + $0xc] sm:$0xf]
        %v1253 = vld [vmem:[#allocation11 + $0x10] sm:$0xf]
        %v1254 = vld [vmem:[#allocation11 + $0x14] sm:$0xf]
        %v1255 = vld [vmem:[#allocation11 + $0x18] sm:$0xf]
        %v1256 = vld [vmem:[#allocation11 + $0x1c] sm:$0xf]
        %v1257 = vld [vmem:[#allocation11 + $0x20] sm:$0xf]
        %v1258 = vld [vmem:[#allocation11 + $0x24] sm:$0xf]
        %v1259 = vld [vmem:[#allocation11 + $0x28] sm:$0xf]
        %v1260 = vld [vmem:[#allocation11 + $0x2c] sm:$0xf]
        %v1261 = vld [vmem:[#allocation11 + $0x30] sm:$0xf]
        %v1262 = vld [vmem:[#allocation11 + $0x34] sm:$0xf]
        %v1263 = vld [vmem:[#allocation11 + $0x38] sm:$0xf]
        %v1264 = vld [vmem:[#allocation11 + $0x3c] sm:$0xf]
        %v1265 = vld [vmem:[%s4] sm:$0x1]
        %v1267 = vlaneseq
        %v1268 = vshrl.u32 %v1267, 7
        %v1269 = vsub.s32 0, %v1268
        %v1270 = vrot.slane %v1265, %v1269
        %v1288 = vunpack.c.l.b16 %v1249
        %v1289 = vunpack.c.l.b16 %v1250
        %v1290 = vunpack.c.l.b16 %v1251
        %v1291 = vunpack.c.l.b16 %v1252
        %v1292 = vunpack.c.l.b16 %v1253
        %v1293 = vunpack.c.l.b16 %v1254
        %v1294 = vunpack.c.l.b16 %v1255
        %v1295 = vunpack.c.l.b16 %v1256
        %v1296 = vunpack.c.l.b16 %v1257
        %v1297 = vunpack.c.l.b16 %v1258
        %v1298 = vunpack.c.l.b16 %v1259
        %v1299 = vunpack.c.l.b16 %v1260
        %v1300 = vunpack.c.l.b16 %v1261
        %v1301 = vunpack.c.l.b16 %v1262
        %v1302 = vunpack.c.l.b16 %v1263
        %v1303 = vunpack.c.l.b16 %v1264
        %v1304 = vpack.c.b16 %v1289, %v1288
        %v1305 = vpack.c.b16 %v1291, %v1290
        %v1306 = vpack.c.b16 %v1293, %v1292
        %v1307 = vpack.c.b16 %v1295, %v1294
        %v1308 = vpack.c.b16 %v1297, %v1296
        %v1309 = vpack.c.b16 %v1299, %v1298
        %v1310 = vpack.c.b16 %v1301, %v1300
        %v1311 = vpack.c.b16 %v1303, %v1302
        %1320 = vmatprep.subr.bf16.mxu0 0
        %1321 = vmatpush1.bf16.msra.mxu0 %v1304
        %1322 = vmatprep.subr.bf16.mxu0 0
        %1323 = vmatpush1.bf16.msra.mxu0 %v1305
        %1324 = vmatprep.subr.bf16.mxu0 0
        %1325 = vmatpush1.bf16.msra.mxu0 %v1306
        %1326 = vmatprep.subr.bf16.mxu0 0
        %1327 = vmatpush1.bf16.msra.mxu0 %v1307
        %1328 = vmatprep.subr.bf16.mxu0 0
        %1329 = vmatpush1.bf16.msra.mxu0 %v1308
        %1330 = vmatprep.subr.bf16.mxu0 0
        %1331 = vmatpush1.bf16.msra.mxu0 %v1309
        %1332 = vmatprep.subr.bf16.mxu0 0
        %1333 = vmatpush1.bf16.msra.mxu0 %v1310
        %1334 = vmatprep.subr.bf16.mxu0 0
        %1335 = vmatpush1.bf16.msra.mxu0 %v1311
        %1336 = vmatprep.subr.bf16.mxu0 0
        %1337 = vmatpush1.bf16.msra.mxu0 0
        %1338 = vmatprep.subr.bf16.mxu0 0
        %1339 = vmatpush1.bf16.msra.mxu0 0
        %1340 = vmatprep.subr.bf16.mxu0 0
        %1341 = vmatpush1.bf16.msra.mxu0 0
        %1342 = vmatprep.subr.bf16.mxu0 0
        %1343 = vmatpush1.bf16.msra.mxu0 0
        %1344 = vmatprep.subr.bf16.mxu0 0
        %1345 = vmatpush1.bf16.msra.mxu0 0
        %1346 = vmatprep.subr.bf16.mxu0 0
        %1347 = vmatpush1.bf16.msra.mxu0 0
        %1348 = vmatprep.subr.bf16.mxu0 0
        %1349 = vmatpush1.bf16.msra.mxu0 0
        %1350 = vmatprep.subr.bf16.mxu0 0
        %1351 = vmatpush1.bf16.msra.mxu0 0
        %1352 = vmatprep.mubr.bf16.mxu0 0
        %1353 = vmatmul.mubr.bf16.gmra.mrb[0].mxu0 %v1248
        %v1354 = vpop.f32.mrb[0].mxu0
        %v1355 = vadd.f32 %v1270, %v1354
        %v1356 = vpop.f32.mrb[0].mxu0
        %v1357 = vpop.f32.mrb[0].mxu0
        %v1358 = vadd.f32 %v1270, %v1357
        %v1359 = vpop.f32.mrb[0].mxu0
        %1360 = vdwg.mxu0
        %s1361 = scalar_lea.vmem %s301, %s731 [#allocation6]
        %v1362 = vld [vmem:[%s1361] sm:$0xff]
        %v1363 = vld [vmem:[%s1361 + $0x8] sm:$0xff]
        %v1364 = vadd.f32 %v1362, %v1355
        %v1365 = vadd.f32 %v1363, %v1358
        %1366 = vadd.xlane.f32.xlu0 %v1364
        %v1367 = vpop.xlane.xlu0 %1366
        %1368 = vadd.xlane.f32.xlu0 %v1365
        %v1369 = vpop.xlane.xlu0 %1368
        %v1370 = vrcp.pop 128.0
        %v1371 = vmul.f32 %v1367, %v1370
        %v1372 = vmul.f32 %v1369, %v1370
        %v1373 = vsub.f32 %v1364, %v1371
        %v1374 = vsub.f32 %v1365, %v1372
        %v1375 = vmul.f32 %v1373, %v1373
        %v1376 = vmul.f32 %v1374, %v1374
        %1377 = vadd.xlane.f32.xlu0 %v1375
        %v1378 = vpop.xlane.xlu0 %1377
        %1379 = vadd.xlane.f32.xlu0 %v1376
        %v1380 = vpop.xlane.xlu0 %1379
        %v1381 = vmul.f32 %v1378, %v1370
        %v1382 = vmul.f32 %v1380, %v1370
        %v1383 = vadd.f32 %v1381, 1e-05
        %v1384 = vadd.f32 %v1382, 1e-05
        %v1385 = vrsqrt.pop %v1383
        %v1386 = vrsqrt.pop %v1384
        %v1387 = vmul.f32 %v1373, %v1385
        %v1388 = vmul.f32 %v1374, %v1386
        %v1389 = vld [vmem:[%s5] sm:$0x1]
        %v1391 = vlaneseq
        %v1392 = vshrl.u32 %v1391, 7
        %v1393 = vsub.s32 0, %v1392
        %v1394 = vrot.slane %v1389, %v1393
        %v1396 = vmul.f32 %v1387, %v1394
        %v1397 = vmul.f32 %v1388, %v1394
        %v1398 = vld [vmem:[%s6] sm:$0x1]
        %v1400 = vlaneseq
        %v1401 = vshrl.u32 %v1400, 7
        %v1402 = vsub.s32 0, %v1401
        %v1403 = vrot.slane %v1398, %v1402
        %v1405 = vadd.f32 %v1396, %v1403
        %v1406 = vadd.f32 %v1397, %v1403
        %1407 = vst [vmem:[%s339] sm:$0xff] %v1405
        %1408 = vst [vmem:[%s339 + $0x8] sm:$0xff] %v1406
        %s1409 = sand.u32 %s199, 1
        %s1410 = scalar_lea.sflag [#allocation8], %s1409
        %s1411 = sand.u32 %s199, 1
        %s1412 = smul.addr %s1411, 16
        %s1413 = scalar_lea.vmem [#allocation12], %s1412
        // Predicated region
        $region65: #{tpu_custom_call.1} parent=47 // pred_check
          %p1414 = pneg %p209
        $region66: #{tpu_custom_call.1} parent=47 // pred_check_branch
          %1416 = sbr.rel (%p1414) target = $region68
        $region67: #{tpu_custom_call.1} parent=47 // pred_region
          %s1417 = smul.u32 2, %s30
          %s1419 = ssub.s32 256, 256
          %1420 = vsyncadd %s1410, %s1419
          %s1421 = smul.addr %s29, 4
          %s1422 = sadd.s32 %s1417, %s1421
          %s1423 = smul.addr %s1422, 128
          %s1424 = scalar_lea.hbm %s7, %s1423
          %s1425 = sshll.u32 %s1413, 4
          %s1426 = int_to_ptr.vmem [resolvable:$true] %s1425
          %1431 = dma.vmem_to_hbm [thread:$0]  %s1426, 256, %s1424, %s1410, 128, 128, 8
        $region68: #{tpu_custom_call.1} parent=47 // pred_fallthru
          _
      $region48: #{tpu_custom_call.1} parent=5 // pred_fallthru
        _
      %p1432 = scmp.le.s32.totalorder 2, %s20
      // Predicated region
      $region69: #{tpu_custom_call.1} parent=5 // pred_check
        %p1433 = pneg %p1432
      $region70: #{tpu_custom_call.1} parent=5 // pred_check_branch
        %1435 = sbr.rel (%p1433) target = $region72
      $region71: #{tpu_custom_call.1} parent=5 // pred_region
        %s1436 = ssub.s32 %s20, 2
        // Predicated region
        $region73: #{tpu_custom_call.1} parent=71 // pred_check
          %p1437 = pneg %p215
        $region74: #{tpu_custom_call.1} parent=71 // pred_check_branch
          %1439 = sbr.rel (%p1437) target = $region76
        $region75: #{tpu_custom_call.1} parent=71 // pred_region
          %s1440 = sand.u32 %s200, 1
          %s1441 = scalar_lea.sflag [#allocation8], %s1440
          %s1442 = sand.u32 %s200, 1
          %s1443 = smul.addr %s1442, 16
          %s1444 = scalar_lea.vmem [#allocation12], %s1443
          %1445 = dma.done %s1441, 256
        $region76: #{tpu_custom_call.1} parent=71 // pred_fallthru
          _
      $region72: #{tpu_custom_call.1} parent=5 // pred_fallthru
        _
    $region6: #{tpu_custom_call.1} parent=1 // loop_footer
      %s24 = sadd.s32 1, %s20
    $region7: #{tpu_custom_call.1} parent=1 // loop_footer_branch
      %19 = sbr.rel target = $region3
    $region8: #{tpu_custom_call.1} parent=1 // loop_exit
      _
    %1446 = vsyncpa [#allocation7], 1
    %s1447 = scalar_lea.sflag [#allocation7], 1
    %1448 = vsyncpa %s1447, 1
    %1449 = vsyncpa [#allocation10], 1
    %1450 = vsyncpa [#allocation8], 1
    %s1451 = scalar_lea.sflag [#allocation8], 1
    %1452 = vsyncpa %s1451, 1

</llo_original>
